<compile_context>
chip_gen: v7x
topology: tpu7x:2x2x1
jax: 0.10.0
libtpu: 0.0.40
codegen_flags: <defaults>
</compile_context>

<pallas_src>
import functools

import jax
import jax.numpy as jnp
from jax.experimental import pallas as pl
from jax.experimental.pallas import tpu as pltpu


def _round_up(x, m):
    return ((x + m - 1) // m) * m


def ff_kernel(x_ref, w1s_ref, b1s_ref, w2_ref, b2_ref, w3_ref, b3_ref, o_ref,
              *, dim_p):
    x = x_ref[...]                                       # bf16 (tm, K_p)

    # Fused first layer + shortcut: one MXU pass consumes the x tile once.
    z = jnp.dot(x, w1s_ref[...], preferred_element_type=jnp.float32) + b1s_ref[...]
    h = jnp.maximum(z[:, :dim_p], 0.0)                   # block layer-1 + ReLU (f32)
    s = z[:, dim_p:]                                     # linear shortcut (f32)

    h = jnp.dot(h.astype(jnp.bfloat16), w2_ref[...],
                preferred_element_type=jnp.float32) + b2_ref[...]
    h = jnp.maximum(h, 0.0)
    h = jnp.dot(h.astype(jnp.bfloat16), w3_ref[...],
                preferred_element_type=jnp.float32) + b3_ref[...]
    h = jnp.maximum(h, 0.0)

    o_ref[...] = (h + s).astype(o_ref.dtype)


def init_params(key, input_dim, dim):
    """nn.Linear-style init; weights stored transposed as (in, out), biases (1, out)."""
    ks = jax.random.split(key, 8)

    def linear(kw, kb, fan_in, fan_out):
        bound = 1.0 / jnp.sqrt(fan_in)
        w = jax.random.uniform(kw, (fan_in, fan_out), jnp.float32, -bound, bound)
        b = jax.random.uniform(kb, (1, fan_out), jnp.float32, -bound, bound)
        return w, b

    w1, b1 = linear(ks[0], ks[1], input_dim, dim)
    w2, b2 = linear(ks[2], ks[3], dim, dim)
    w3, b3 = linear(ks[4], ks[5], dim, dim)
    ws, bs = linear(ks[6], ks[7], input_dim, dim)
    return dict(w1=w1, b1=b1, w2=w2, b2=b2, w3=w3, b3=b3, ws=ws, bs=bs)


def prepare_params(params, input_dim, dim):
    """Pad feature dims to lane-dense 128 multiples, fuse w1|ws, cast weights to bf16."""
    kp = _round_up(input_dim, 128)
    dp = _round_up(dim, 128)

    def pad_w(w, rows, cols):
        return jnp.pad(w, ((0, rows - w.shape[0]), (0, cols - w.shape[1])))

    def pad_b(b, cols):
        return jnp.pad(b, ((0, 0), (0, cols - b.shape[1])))

    w1 = pad_w(params["w1"], kp, dp)
    ws = pad_w(params["ws"], kp, dp)
    b1 = pad_b(params["b1"], dp)
    bs = pad_b(params["bs"], dp)

    return dict(
        w1s=jnp.concatenate([w1, ws], axis=1).astype(jnp.bfloat16),  # (kp, 2*dp)
        b1s=jnp.concatenate([b1, bs], axis=1).astype(jnp.float32),   # (1, 2*dp)
        w2=pad_w(params["w2"], dp, dp).astype(jnp.bfloat16),
        b2=pad_b(params["b2"], dp).astype(jnp.float32),
        w3=pad_w(params["w3"], dp, dp).astype(jnp.bfloat16),
        b3=pad_b(params["b3"], dp).astype(jnp.float32),
        input_dim=input_dim, dim=dim, kp=kp, dp=dp,
    )


def ff_forward(x, prepped, *, tm=None):
    """x: (N, input_dim) float32.  prepped: output of prepare_params."""
    N, input_dim = x.shape
    assert input_dim == prepped["input_dim"]
    dim, kp, dp = prepped["dim"], prepped["kp"], prepped["dp"]

    if tm is None:
        # At least 2 grid steps so v7x's second TensorCore gets work; 8-row aligned.
        tm = min(512, max(8, _round_up(pl.cdiv(N, 2), 8)))
    n_p = _round_up(N, tm)

    # Pad rows to the tile size and features to lane-dense 128 multiples; cast x
    # to bf16 once here (MXU-native input, halves x HBM traffic).
    x_p = jnp.zeros((n_p, kp), jnp.bfloat16).at[:N, :input_dim].set(
        x.astype(jnp.bfloat16))

    grid = (n_p // tm,)
    weights = (prepped["w1s"], prepped["b1s"], prepped["w2"], prepped["b2"],
               prepped["w3"], prepped["b3"])

    flops = 2 * n_p * (kp * 2 * dp + 2 * dp * dp)
    bytes_accessed = int(x_p.size) * 2 + int(n_p * dp) * 4
    for w in weights:
        bytes_accessed += int(w.size) * w.dtype.itemsize

    def build(single_buffer_weights):
        def const(shape):
            if single_buffer_weights:
                # Constant-index blocks need no double buffering (halves weight VMEM).
                return pl.BlockSpec(shape, lambda i: (0, 0),
                                    pipeline_mode=pl.Buffered(1))
            return pl.BlockSpec(shape, lambda i: (0, 0))

        return pl.pallas_call(
            functools.partial(ff_kernel, dim_p=dp),
            out_shape=jax.ShapeDtypeStruct((n_p, dp), jnp.float32),
            grid_spec=pltpu.PrefetchScalarGridSpec(
                num_scalar_prefetch=0,
                grid=grid,
                in_specs=[
                    pl.BlockSpec((tm, kp), lambda i: (i, 0)),   # x row tile
                    const((kp, 2 * dp)),                        # w1 | ws (fused)
                    const((1, 2 * dp)),                         # b1 | bs (fused)
                    const((dp, dp)),                            # w2
                    const((1, dp)),                             # b2
                    const((dp, dp)),                            # w3
                    const((1, dp)),                             # b3
                ],
                out_specs=pl.BlockSpec((tm, dp), lambda i: (i, 0)),
            ),
            compiler_params=pltpu.CompilerParams(
                dimension_semantics=("parallel",)),
            cost_estimate=pl.CostEstimate(
                flops=flops, transcendentals=0, bytes_accessed=bytes_accessed),
        )

    # TODO(synk): for dim in the thousands, column-tile w2/w3 with an extra grid
    # axis and raise vmem_limit_bytes instead of keeping whole weights resident.
    try:
        out = build(True)(x_p, *weights)
    except Exception:
        # pipeline_mode=pl.Buffered(1) unsupported on this jax/backend combo.
        out = build(False)(x_p, *weights)

    return out[:N, :dim]


def ff_reference(x, p):
    """Pure-JAX reference with the same bf16-input / f32-accumulate quantization."""
    bdot = lambda a, w: jnp.dot(a.astype(jnp.bfloat16), w.astype(jnp.bfloat16),
                                preferred_element_type=jnp.float32)
    relu = lambda t: jnp.maximum(t, 0.0)
    h = relu(bdot(x, p["w1"]) + p["b1"])
    h = relu(bdot(h, p["w2"]) + p["b2"])
    h = relu(bdot(h, p["w3"]) + p["b3"])
    return h + bdot(x, p["ws"]) + p["bs"]


if __name__ == "__main__":
    key = jax.random.PRNGKey(0)
    k_x, k_p = jax.random.split(key)

    dim = 32                 # Net embedding dim
    input_dim = 2 * dim      # FF in Net consumes 2*dim (set2set output)
    N = 64                   # rows of embeddings

    x = jax.random.normal(k_x, (N, input_dim), jnp.float32)
    params = init_params(k_p, input_dim, dim)
    prepped = prepare_params(params, input_dim, dim)

    out = ff_forward(x, prepped)
    out = jax.block_until_ready(out)

    ref = ff_reference(x, params)
    assert out.shape == (N, dim)
    max_err = float(jnp.max(jnp.abs(out - ref)))
    assert jnp.allclose(out, ref, atol=2e-3, rtol=2e-3), f"mismatch vs reference: {max_err}"

    print("KERNEL_OK")
</pallas_src>

<mosaic_0001>
module attributes {stable_mosaic.version = 11 : i64} {
  func.func @ff_kernel(%arg0: i32, %arg1: memref<32x128xbf16, #tpu.memory_space<vmem>>, %arg2: memref<128x256xbf16, #tpu.memory_space<vmem>>, %arg3: memref<1x256xf32, #tpu.memory_space<vmem>>, %arg4: memref<128x128xbf16, #tpu.memory_space<vmem>>, %arg5: memref<1x128xf32, #tpu.memory_space<vmem>>, %arg6: memref<128x128xbf16, #tpu.memory_space<vmem>>, %arg7: memref<1x128xf32, #tpu.memory_space<vmem>>, %arg8: memref<32x128xf32, #tpu.memory_space<vmem>>) attributes {dimension_semantics = [#tpu.dimension_semantics<parallel>], iteration_bounds = array<i64: 2>, scalar_prefetch = 0 : i64, scratch_operands = 0 : i64, tpu.core_type = #tpu.core_type<tc>, window_params = [{transform_indices = @transform_0, window_bounds = array<i64: 32, 128>}, {pipeline_mode = #tpu.pipeline_mode<synchronous>, transform_indices = @transform_1, window_bounds = array<i64: 128, 256>}, {pipeline_mode = #tpu.pipeline_mode<synchronous>, transform_indices = @transform_2, window_bounds = array<i64: 1, 256>}, {pipeline_mode = #tpu.pipeline_mode<synchronous>, transform_indices = @transform_3, window_bounds = array<i64: 128, 128>}, {pipeline_mode = #tpu.pipeline_mode<synchronous>, transform_indices = @transform_4, window_bounds = array<i64: 1, 128>}, {pipeline_mode = #tpu.pipeline_mode<synchronous>, transform_indices = @transform_5, window_bounds = array<i64: 128, 128>}, {pipeline_mode = #tpu.pipeline_mode<synchronous>, transform_indices = @transform_6, window_bounds = array<i64: 1, 128>}, {transform_indices = @transform_7, window_bounds = array<i64: 32, 128>}]} {
    %c0 = arith.constant 0 : index
    %c0_0 = arith.constant 0 : index
    %0 = vector.load %arg1[%c0, %c0_0] : memref<32x128xbf16, #tpu.memory_space<vmem>>, vector<32x128xbf16>
    %c0_1 = arith.constant 0 : index
    %c0_2 = arith.constant 0 : index
    %1 = vector.load %arg2[%c0_1, %c0_2] : memref<128x256xbf16, #tpu.memory_space<vmem>>, vector<128x256xbf16>
    %cst = arith.constant dense<0.000000e+00> : vector<32x256xf32>
    %2 = tpu.matmul %0, %1, %cst {dimension_numbers = #tpu.dot_dimension_numbers<[1], [0], [0], [1], [0, 0, 1, 1], [], []>} : vector<32x128xbf16>, vector<128x256xbf16>, vector<32x256xf32> -> vector<32x256xf32>
    %c0_3 = arith.constant 0 : index
    %c0_4 = arith.constant 0 : index
    %3 = vector.load %arg3[%c0_3, %c0_4] : memref<1x256xf32, #tpu.memory_space<vmem>>, vector<1x256xf32>
    %4 = vector.broadcast %3 : vector<1x256xf32> to vector<32x256xf32>
    %5 = arith.addf %2, %4 : vector<32x256xf32>
    %6 = vector.extract_strided_slice %5 {offsets = [0, 0], sizes = [32, 128], strides = [1, 1]} : vector<32x256xf32> to vector<32x128xf32>
    %cst_5 = arith.constant 0.000000e+00 : f32
    %7 = vector.broadcast %cst_5 : f32 to vector<32x128xf32>
    %8 = arith.maximumf %6, %7 : vector<32x128xf32>
    %9 = vector.extract_strided_slice %5 {offsets = [0, 128], sizes = [32, 128], strides = [1, 1]} : vector<32x256xf32> to vector<32x128xf32>
    %10 = arith.truncf %8 : vector<32x128xf32> to vector<32x128xbf16>
    %c0_6 = arith.constant 0 : index
    %c0_7 = arith.constant 0 : index
    %11 = vector.load %arg4[%c0_6, %c0_7] : memref<128x128xbf16, #tpu.memory_space<vmem>>, vector<128x128xbf16>
    %cst_8 = arith.constant dense<0.000000e+00> : vector<32x128xf32>
    %12 = tpu.matmul %10, %11, %cst_8 {dimension_numbers = #tpu.dot_dimension_numbers<[1], [0], [0], [1], [0, 0, 1, 1], [], []>} : vector<32x128xbf16>, vector<128x128xbf16>, vector<32x128xf32> -> vector<32x128xf32>
    %c0_9 = arith.constant 0 : index
    %c0_10 = arith.constant 0 : index
    %13 = vector.load %arg5[%c0_9, %c0_10] : memref<1x128xf32, #tpu.memory_space<vmem>>, vector<1x128xf32>
    %14 = vector.broadcast %13 : vector<1x128xf32> to vector<32x128xf32>
    %15 = arith.addf %12, %14 : vector<32x128xf32>
    %cst_11 = arith.constant 0.000000e+00 : f32
    %16 = vector.broadcast %cst_11 : f32 to vector<32x128xf32>
    %17 = arith.maximumf %15, %16 : vector<32x128xf32>
    %18 = arith.truncf %17 : vector<32x128xf32> to vector<32x128xbf16>
    %c0_12 = arith.constant 0 : index
    %c0_13 = arith.constant 0 : index
    %19 = vector.load %arg6[%c0_12, %c0_13] : memref<128x128xbf16, #tpu.memory_space<vmem>>, vector<128x128xbf16>
    %cst_14 = arith.constant dense<0.000000e+00> : vector<32x128xf32>
    %20 = tpu.matmul %18, %19, %cst_14 {dimension_numbers = #tpu.dot_dimension_numbers<[1], [0], [0], [1], [0, 0, 1, 1], [], []>} : vector<32x128xbf16>, vector<128x128xbf16>, vector<32x128xf32> -> vector<32x128xf32>
    %c0_15 = arith.constant 0 : index
    %c0_16 = arith.constant 0 : index
    %21 = vector.load %arg7[%c0_15, %c0_16] : memref<1x128xf32, #tpu.memory_space<vmem>>, vector<1x128xf32>
    %22 = vector.broadcast %21 : vector<1x128xf32> to vector<32x128xf32>
    %23 = arith.addf %20, %22 : vector<32x128xf32>
    %cst_17 = arith.constant 0.000000e+00 : f32
    %24 = vector.broadcast %cst_17 : f32 to vector<32x128xf32>
    %25 = arith.maximumf %23, %24 : vector<32x128xf32>
    %26 = arith.addf %25, %9 : vector<32x128xf32>
    %c0_18 = arith.constant 0 : index
    %c0_19 = arith.constant 0 : index
    %27 = vector.load %arg8[%c0_18, %c0_19] : memref<32x128xf32, #tpu.memory_space<vmem>>, vector<32x128xf32>
    tpu.vector_store %arg8[%c0_18, %c0_19], %26 {strides = array<i32>} : memref<32x128xf32, #tpu.memory_space<vmem>>, vector<32x128xf32>,
    return
  }
  func.func @transform_0(%arg0: i32) -> (i32, i32) {
    %c0_i32 = arith.constant 0 : i32
    %c0_i32_0 = arith.constant 0 : i32
    return %arg0, %c0_i32 : i32, i32
  }
  func.func @transform_1(%arg0: i32) -> (i32, i32) {
    %c0_i32 = arith.constant 0 : i32
    %c0_i32_0 = arith.constant 0 : i32
    %c0_i32_1 = arith.constant 0 : i32
    return %c0_i32, %c0_i32_0 : i32, i32
  }
  func.func @transform_2(%arg0: i32) -> (i32, i32) {
    %c0_i32 = arith.constant 0 : i32
    %c0_i32_0 = arith.constant 0 : i32
    %c0_i32_1 = arith.constant 0 : i32
    return %c0_i32, %c0_i32_0 : i32, i32
  }
  func.func @transform_3(%arg0: i32) -> (i32, i32) {
    %c0_i32 = arith.constant 0 : i32
    %c0_i32_0 = arith.constant 0 : i32
    %c0_i32_1 = arith.constant 0 : i32
    return %c0_i32, %c0_i32_0 : i32, i32
  }
  func.func @transform_4(%arg0: i32) -> (i32, i32) {
    %c0_i32 = arith.constant 0 : i32
    %c0_i32_0 = arith.constant 0 : i32
    %c0_i32_1 = arith.constant 0 : i32
    return %c0_i32, %c0_i32_0 : i32, i32
  }
  func.func @transform_5(%arg0: i32) -> (i32, i32) {
    %c0_i32 = arith.constant 0 : i32
    %c0_i32_0 = arith.constant 0 : i32
    %c0_i32_1 = arith.constant 0 : i32
    return %c0_i32, %c0_i32_0 : i32, i32
  }
  func.func @transform_6(%arg0: i32) -> (i32, i32) {
    %c0_i32 = arith.constant 0 : i32
    %c0_i32_0 = arith.constant 0 : i32
    %c0_i32_1 = arith.constant 0 : i32
    return %c0_i32, %c0_i32_0 : i32, i32
  }
  func.func @transform_7(%arg0: i32) -> (i32, i32) {
    %c0_i32 = arith.constant 0 : i32
    %c0_i32_0 = arith.constant 0 : i32
    return %arg0, %c0_i32 : i32, i32
  }
}

module attributes {stable_mosaic.version = 11 : i64} {
  func.func @ff_kernel(%arg0: i32, %arg1: memref<32x128xbf16, #tpu.memory_space<vmem>>, %arg2: memref<128x256xbf16, #tpu.memory_space<vmem>>, %arg3: memref<1x256xf32, #tpu.memory_space<vmem>>, %arg4: memref<128x128xbf16, #tpu.memory_space<vmem>>, %arg5: memref<1x128xf32, #tpu.memory_space<vmem>>, %arg6: memref<128x128xbf16, #tpu.memory_space<vmem>>, %arg7: memref<1x128xf32, #tpu.memory_space<vmem>>, %arg8: memref<32x128xf32, #tpu.memory_space<vmem>>) attributes {dimension_semantics = [#tpu.dimension_semantics<parallel>], iteration_bounds = array<i64: 2>, scalar_prefetch = 0 : i64, scratch_operands = 0 : i64, tpu.core_type = #tpu.core_type<tc>, window_params = [{transform_indices = @transform_0, window_bounds = array<i64: 32, 128>}, {pipeline_mode = #tpu.pipeline_mode<synchronous>, transform_indices = @transform_1, window_bounds = array<i64: 128, 256>}, {pipeline_mode = #tpu.pipeline_mode<synchronous>, transform_indices = @transform_2, window_bounds = array<i64: 1, 256>}, {pipeline_mode = #tpu.pipeline_mode<synchronous>, transform_indices = @transform_3, window_bounds = array<i64: 128, 128>}, {pipeline_mode = #tpu.pipeline_mode<synchronous>, transform_indices = @transform_4, window_bounds = array<i64: 1, 128>}, {pipeline_mode = #tpu.pipeline_mode<synchronous>, transform_indices = @transform_5, window_bounds = array<i64: 128, 128>}, {pipeline_mode = #tpu.pipeline_mode<synchronous>, transform_indices = @transform_6, window_bounds = array<i64: 1, 128>}, {transform_indices = @transform_7, window_bounds = array<i64: 32, 128>}]} {
    %c0 = arith.constant 0 : index
    %c0_0 = arith.constant 0 : index
    %0 = vector.load %arg1[%c0, %c0_0] : memref<32x128xbf16, #tpu.memory_space<vmem>>, vector<32x128xbf16>
    %c0_1 = arith.constant 0 : index
    %c0_2 = arith.constant 0 : index
    %1 = vector.load %arg2[%c0_1, %c0_2] : memref<128x256xbf16, #tpu.memory_space<vmem>>, vector<128x256xbf16>
    %cst = arith.constant dense<0.000000e+00> : vector<32x256xf32>
    %2 = tpu.matmul %0, %1, %cst {dimension_numbers = #tpu.dot_dimension_numbers<[1], [0], [0], [1], [0, 0, 1, 1], [], []>} : vector<32x128xbf16>, vector<128x256xbf16>, vector<32x256xf32> -> vector<32x256xf32>
    %c0_3 = arith.constant 0 : index
    %c0_4 = arith.constant 0 : index
    %3 = vector.load %arg3[%c0_3, %c0_4] : memref<1x256xf32, #tpu.memory_space<vmem>>, vector<1x256xf32>
    %4 = vector.broadcast %3 : vector<1x256xf32> to vector<32x256xf32>
    %5 = arith.addf %2, %4 : vector<32x256xf32>
    %6 = vector.extract_strided_slice %5 {offsets = [0, 0], sizes = [32, 128], strides = [1, 1]} : vector<32x256xf32> to vector<32x128xf32>
    %cst_5 = arith.constant 0.000000e+00 : f32
    %7 = vector.broadcast %cst_5 : f32 to vector<32x128xf32>
    %8 = arith.maximumf %6, %7 : vector<32x128xf32>
    %9 = vector.extract_strided_slice %5 {offsets = [0, 128], sizes = [32, 128], strides = [1, 1]} : vector<32x256xf32> to vector<32x128xf32>
    %10 = arith.truncf %8 : vector<32x128xf32> to vector<32x128xbf16>
    %c0_6 = arith.constant 0 : index
    %c0_7 = arith.constant 0 : index
    %11 = vector.load %arg4[%c0_6, %c0_7] : memref<128x128xbf16, #tpu.memory_space<vmem>>, vector<128x128xbf16>
    %cst_8 = arith.constant dense<0.000000e+00> : vector<32x128xf32>
    %12 = tpu.matmul %10, %11, %cst_8 {dimension_numbers = #tpu.dot_dimension_numbers<[1], [0], [0], [1], [0, 0, 1, 1], [], []>} : vector<32x128xbf16>, vector<128x128xbf16>, vector<32x128xf32> -> vector<32x128xf32>
    %c0_9 = arith.constant 0 : index
    %c0_10 = arith.constant 0 : index
    %13 = vector.load %arg5[%c0_9, %c0_10] : memref<1x128xf32, #tpu.memory_space<vmem>>, vector<1x128xf32>
    %14 = vector.broadcast %13 : vector<1x128xf32> to vector<32x128xf32>
    %15 = arith.addf %12, %14 : vector<32x128xf32>
    %cst_11 = arith.constant 0.000000e+00 : f32
    %16 = vector.broadcast %cst_11 : f32 to vector<32x128xf32>
    %17 = arith.maximumf %15, %16 : vector<32x128xf32>
    %18 = arith.truncf %17 : vector<32x128xf32> to vector<32x128xbf16>
    %c0_12 = arith.constant 0 : index
    %c0_13 = arith.constant 0 : index
    %19 = vector.load %arg6[%c0_12, %c0_13] : memref<128x128xbf16, #tpu.memory_space<vmem>>, vector<128x128xbf16>
    %cst_14 = arith.constant dense<0.000000e+00> : vector<32x128xf32>
    %20 = tpu.matmul %18, %19, %cst_14 {dimension_numbers = #tpu.dot_dimension_numbers<[1], [0], [0], [1], [0, 0, 1, 1], [], []>} : vector<32x128xbf16>, vector<128x128xbf16>, vector<32x128xf32> -> vector<32x128xf32>
    %c0_15 = arith.constant 0 : index
    %c0_16 = arith.constant 0 : index
    %21 = vector.load %arg7[%c0_15, %c0_16] : memref<1x128xf32, #tpu.memory_space<vmem>>, vector<1x128xf32>
    %22 = vector.broadcast %21 : vector<1x128xf32> to vector<32x128xf32>
    %23 = arith.addf %20, %22 : vector<32x128xf32>
    %cst_17 = arith.constant 0.000000e+00 : f32
    %24 = vector.broadcast %cst_17 : f32 to vector<32x128xf32>
    %25 = arith.maximumf %23, %24 : vector<32x128xf32>
    %26 = arith.addf %25, %9 : vector<32x128xf32>
    %c0_18 = arith.constant 0 : index
    %c0_19 = arith.constant 0 : index
    %27 = vector.load %arg8[%c0_18, %c0_19] : memref<32x128xf32, #tpu.memory_space<vmem>>, vector<32x128xf32>
    tpu.vector_store %arg8[%c0_18, %c0_19], %26 {strides = array<i32>} : memref<32x128xf32, #tpu.memory_space<vmem>>, vector<32x128xf32>,
    return
  }
  func.func @transform_0(%arg0: i32) -> (i32, i32) {
    %c0_i32 = arith.constant 0 : i32
    %c0_i32_0 = arith.constant 0 : i32
    return %arg0, %c0_i32 : i32, i32
  }
  func.func @transform_1(%arg0: i32) -> (i32, i32) {
    %c0_i32 = arith.constant 0 : i32
    %c0_i32_0 = arith.constant 0 : i32
    %c0_i32_1 = arith.constant 0 : i32
    return %c0_i32, %c0_i32_0 : i32, i32
  }
  func.func @transform_2(%arg0: i32) -> (i32, i32) {
    %c0_i32 = arith.constant 0 : i32
    %c0_i32_0 = arith.constant 0 : i32
    %c0_i32_1 = arith.constant 0 : i32
    return %c0_i32, %c0_i32_0 : i32, i32
  }
  func.func @transform_3(%arg0: i32) -> (i32, i32) {
    %c0_i32 = arith.constant 0 : i32
    %c0_i32_0 = arith.constant 0 : i32
    %c0_i32_1 = arith.constant 0 : i32
    return %c0_i32, %c0_i32_0 : i32, i32
  }
  func.func @transform_4(%arg0: i32) -> (i32, i32) {
    %c0_i32 = arith.constant 0 : i32
    %c0_i32_0 = arith.constant 0 : i32
    %c0_i32_1 = arith.constant 0 : i32
    return %c0_i32, %c0_i32_0 : i32, i32
  }
  func.func @transform_5(%arg0: i32) -> (i32, i32) {
    %c0_i32 = arith.constant 0 : i32
    %c0_i32_0 = arith.constant 0 : i32
    %c0_i32_1 = arith.constant 0 : i32
    return %c0_i32, %c0_i32_0 : i32, i32
  }
  func.func @transform_6(%arg0: i32) -> (i32, i32) {
    %c0_i32 = arith.constant 0 : i32
    %c0_i32_0 = arith.constant 0 : i32
    %c0_i32_1 = arith.constant 0 : i32
    return %c0_i32, %c0_i32_0 : i32, i32
  }
  func.func @transform_7(%arg0: i32) -> (i32, i32) {
    %c0_i32 = arith.constant 0 : i32
    %c0_i32_0 = arith.constant 0 : i32
    return %arg0, %c0_i32 : i32, i32
  }
}

</mosaic_0001>

<llo_original>
// kernel: tpu_custom_call.1
$region0: #{tpu_custom_call.1}
  #allocation0 [shape = 'u32[]', space=smem, size = 0x4, offset = 0x4, fixed_abs, tag = 'smem constant byte address 0x4 - core index']
  #allocation1 [shape = 'u32[144,128]{1,0:T(1,128)}', space=vmem, size = 0x12000, scoped, tag = 'internal scratch']
  %s0 = inlined_call_operand.hbm [shape: bf16[64,128], index: 0, kind: input, shape index: {}]
  %s1 = inlined_call_operand.hbm [shape: bf16[128,256], index: 1, kind: input, shape index: {}]
  %s2 = inlined_call_operand.vmem [shape: f32[1,256], index: 2, kind: input, shape index: {}]
  %s3 = inlined_call_operand.hbm [shape: bf16[128,128], index: 3, kind: input, shape index: {}]
  %s4 = inlined_call_operand.vmem [shape: f32[1,128], index: 4, kind: input, shape index: {}]
  %s5 = inlined_call_operand.hbm [shape: bf16[128,128], index: 5, kind: input, shape index: {}]
  %s6 = inlined_call_operand.vmem [shape: f32[1,128], index: 6, kind: input, shape index: {}]
  %s7 = inlined_call_operand.hbm [shape: f32[64,128], index: 7, kind: output, shape index: {}]
  %s8 = sld [smem:[#allocation0]]
  $region77: #{tpu_custom_call.1} parent=0
    _
  %s10 = ssub.s32 1, %s8
  %s11 = scalar_select 0, %s10, %s8
  $region1: #{tpu_custom_call.1} parent=0
    #allocation2 [shape = 'u8[16384]{0}', space=vmem, size = 0x4000, scoped, tag = 'input window, operand 0']
    #allocation3 [shape = 's32[2]{0}', space=sflag, size = 0x8, scoped, tag = 'scoped memory for tpu_custom_call.1']
    #allocation4 [shape = 's32[2]{0}', space=sflag, size = 0x8, scoped, tag = 'scoped memory for tpu_custom_call.1']
    #allocation5 [shape = 'u8[65536]{0}', space=vmem, size = 0x10000, scoped, tag = 'input window, operand 1, single buffered']
    #allocation6 [shape = 's32[1]{0}', space=sflag, size = 0x4, scoped, tag = 'scoped memory for tpu_custom_call.1']
    #allocation7 [shape = 'u8[32768]{0}', space=vmem, size = 0x8000, scoped, tag = 'input window, operand 3, single buffered']
    #allocation8 [shape = 'u8[32768]{0}', space=vmem, size = 0x8000, scoped, tag = 'input window, operand 5, single buffered']
    #allocation9 [shape = 's32[1]{0}', space=sflag, size = 0x4, scoped, tag = 'scoped memory for tpu_custom_call.1']
    #allocation10 [shape = 'u8[32768]{0}', space=vmem, size = 0x8000, scoped, tag = 'output window, operand 0']
    %12 = vsyncpa [#allocation3], 0
    %s13 = scalar_lea.sflag [#allocation3], 1
    %14 = vsyncpa %s13, 0
    %15 = vsyncpa [#allocation6], 0
    %16 = vsyncpa [#allocation9], 0
    %17 = vsyncpa [#allocation4], 0
    %s18 = scalar_lea.sflag [#allocation4], 1
    %19 = vsyncpa %s18, 0
    loop: start=0, step=1, limit=4
    $region2: #{tpu_custom_call.1} parent=1 // loop_pre_header
      _
    $region3: #{tpu_custom_call.1} parent=1 // loop_header
      %s21 = sphi 0, %s25
      %p22 = scmp.ge.s32.totalorder %s21, 4
      %s31 = sphi 0, %s33
      %s34 = sphi 0, %s31
      %s35 = sphi 0, %s34
      %s51 = sphi 0, %s35
      %s55 = sphi 0, %s55
      %s57 = sphi 0, %s55
      %s58 = sphi 0, %s57
      %s72 = sphi 0, %s58
      %s76 = sphi 0, %s76
      %s78 = sphi 0, %s76
      %s79 = sphi 0, %s78
      %s93 = sphi 0, %s79
      %s97 = sphi 0, %s97
      %s99 = sphi 0, %s97
      %s100 = sphi 0, %s99
      %s114 = sphi 0, %s100
      %s118 = sphi 0, %s118
      %s120 = sphi 0, %s118
      %s121 = sphi 0, %s120
      %s135 = sphi 0, %s121
      %s139 = sphi 0, %s139
      %s141 = sphi 0, %s139
      %s142 = sphi 0, %s141
      %s156 = sphi 0, %s142
      %s160 = sphi 0, %s160
      %s162 = sphi 0, %s160
      %s163 = sphi 0, %s162
      %s177 = sphi 0, %s163
      %s183 = sphi 0, %s185
      %s186 = sphi 0, %s183
      %s187 = sphi 0, %s186
      %s203 = sphi 0, %s187
    $region4: #{tpu_custom_call.1} parent=1 // loop_header_branch
      %24 = sbr.rel (%p22) target = $region8
    $region5: #{tpu_custom_call.1} parent=1 // loop_body
      %s26 = ssub.s32 %s21, 1
      %s27 = ssub.s32 %s21, 2
      %s28 = sadd.s32 %s21, 1
      %s29 = ssub.s32 %s21, %s28
      %p30 = scmp.eq.s32.totalorder %s29, 0
      %s32 = sadd.s32 %s31, 1
      %s33 = scalar_select %p30, %s31, %s32
      %p36 = pneg %p30
      %p37 = scmp.eq.s32.totalorder %s21, 1
      %p38 = por %p36, %p37
      %p39 = scmp.ne.s32.totalorder %s31, %s34
      %p40 = scmp.eq.s32.totalorder %s21, 0
      %p41 = por %p39, %p40
      %p42 = scmp.ne.s32.totalorder %s31, %s34
      %p43 = scmp.eq.s32.totalorder %s26, 1
      %p44 = por %p42, %p43
      %p45 = scmp.ne.s32.totalorder %s34, %s35
      %p46 = scmp.eq.s32.totalorder %s26, 0
      %p47 = por %p45, %p46
      %p48 = scmp.ne.s32.totalorder %s34, %s35
      %p49 = scmp.eq.s32.totalorder %s27, 1
      %p50 = por %p48, %p49
      %p52 = scmp.ne.s32.totalorder %s35, %s51
      %p53 = scmp.eq.s32.totalorder %s27, 0
      %p54 = por %p52, %p53
      %s56 = sadd.s32 %s55, 1
      %p59 = scmp.eq.s32.totalorder %s21, 1
      %p60 = scmp.ne.s32.totalorder %s55, %s57
      %p61 = scmp.eq.s32.totalorder %s21, 0
      %p62 = por %p60, %p61
      %p63 = scmp.ne.s32.totalorder %s55, %s57
      %p64 = scmp.eq.s32.totalorder %s26, 1
      %p65 = por %p63, %p64
      %p66 = scmp.ne.s32.totalorder %s57, %s58
      %p67 = scmp.eq.s32.totalorder %s26, 0
      %p68 = por %p66, %p67
      %p69 = scmp.ne.s32.totalorder %s57, %s58
      %p70 = scmp.eq.s32.totalorder %s27, 1
      %p71 = por %p69, %p70
      %p73 = scmp.ne.s32.totalorder %s58, %s72
      %p74 = scmp.eq.s32.totalorder %s27, 0
      %p75 = por %p73, %p74
      %s77 = sadd.s32 %s76, 1
      %p80 = scmp.eq.s32.totalorder %s21, 1
      %p81 = scmp.ne.s32.totalorder %s76, %s78
      %p82 = scmp.eq.s32.totalorder %s21, 0
      %p83 = por %p81, %p82
      %p84 = scmp.ne.s32.totalorder %s76, %s78
      %p85 = scmp.eq.s32.totalorder %s26, 1
      %p86 = por %p84, %p85
      %p87 = scmp.ne.s32.totalorder %s78, %s79
      %p88 = scmp.eq.s32.totalorder %s26, 0
      %p89 = por %p87, %p88
      %p90 = scmp.ne.s32.totalorder %s78, %s79
      %p91 = scmp.eq.s32.totalorder %s27, 1
      %p92 = por %p90, %p91
      %p94 = scmp.ne.s32.totalorder %s79, %s93
      %p95 = scmp.eq.s32.totalorder %s27, 0
      %p96 = por %p94, %p95
      %s98 = sadd.s32 %s97, 1
      %p101 = scmp.eq.s32.totalorder %s21, 1
      %p102 = scmp.ne.s32.totalorder %s97, %s99
      %p103 = scmp.eq.s32.totalorder %s21, 0
      %p104 = por %p102, %p103
      %p105 = scmp.ne.s32.totalorder %s97, %s99
      %p106 = scmp.eq.s32.totalorder %s26, 1
      %p107 = por %p105, %p106
      %p108 = scmp.ne.s32.totalorder %s99, %s100
      %p109 = scmp.eq.s32.totalorder %s26, 0
      %p110 = por %p108, %p109
      %p111 = scmp.ne.s32.totalorder %s99, %s100
      %p112 = scmp.eq.s32.totalorder %s27, 1
      %p113 = por %p111, %p112
      %p115 = scmp.ne.s32.totalorder %s100, %s114
      %p116 = scmp.eq.s32.totalorder %s27, 0
      %p117 = por %p115, %p116
      %s119 = sadd.s32 %s118, 1
      %p122 = scmp.eq.s32.totalorder %s21, 1
      %p123 = scmp.ne.s32.totalorder %s118, %s120
      %p124 = scmp.eq.s32.totalorder %s21, 0
      %p125 = por %p123, %p124
      %p126 = scmp.ne.s32.totalorder %s118, %s120
      %p127 = scmp.eq.s32.totalorder %s26, 1
      %p128 = por %p126, %p127
      %p129 = scmp.ne.s32.totalorder %s120, %s121
      %p130 = scmp.eq.s32.totalorder %s26, 0
      %p131 = por %p129, %p130
      %p132 = scmp.ne.s32.totalorder %s120, %s121
      %p133 = scmp.eq.s32.totalorder %s27, 1
      %p134 = por %p132, %p133
      %p136 = scmp.ne.s32.totalorder %s121, %s135
      %p137 = scmp.eq.s32.totalorder %s27, 0
      %p138 = por %p136, %p137
      %s140 = sadd.s32 %s139, 1
      %p143 = scmp.eq.s32.totalorder %s21, 1
      %p144 = scmp.ne.s32.totalorder %s139, %s141
      %p145 = scmp.eq.s32.totalorder %s21, 0
      %p146 = por %p144, %p145
      %p147 = scmp.ne.s32.totalorder %s139, %s141
      %p148 = scmp.eq.s32.totalorder %s26, 1
      %p149 = por %p147, %p148
      %p150 = scmp.ne.s32.totalorder %s141, %s142
      %p151 = scmp.eq.s32.totalorder %s26, 0
      %p152 = por %p150, %p151
      %p153 = scmp.ne.s32.totalorder %s141, %s142
      %p154 = scmp.eq.s32.totalorder %s27, 1
      %p155 = por %p153, %p154
      %p157 = scmp.ne.s32.totalorder %s142, %s156
      %p158 = scmp.eq.s32.totalorder %s27, 0
      %p159 = por %p157, %p158
      %s161 = sadd.s32 %s160, 1
      %p164 = scmp.eq.s32.totalorder %s21, 1
      %p165 = scmp.ne.s32.totalorder %s160, %s162
      %p166 = scmp.eq.s32.totalorder %s21, 0
      %p167 = por %p165, %p166
      %p168 = scmp.ne.s32.totalorder %s160, %s162
      %p169 = scmp.eq.s32.totalorder %s26, 1
      %p170 = por %p168, %p169
      %p171 = scmp.ne.s32.totalorder %s162, %s163
      %p172 = scmp.eq.s32.totalorder %s26, 0
      %p173 = por %p171, %p172
      %p174 = scmp.ne.s32.totalorder %s162, %s163
      %p175 = scmp.eq.s32.totalorder %s27, 1
      %p176 = por %p174, %p175
      %p178 = scmp.ne.s32.totalorder %s163, %s177
      %p179 = scmp.eq.s32.totalorder %s27, 0
      %p180 = por %p178, %p179
      %s181 = ssub.s32 %s21, %s28
      %p182 = scmp.eq.s32.totalorder %s181, 0
      %s184 = sadd.s32 %s183, 1
      %s185 = scalar_select %p182, %s183, %s184
      %p188 = pneg %p182
      %p189 = scmp.eq.s32.totalorder %s21, 1
      %p190 = por %p188, %p189
      %p191 = scmp.ne.s32.totalorder %s183, %s186
      %p192 = scmp.eq.s32.totalorder %s21, 0
      %p193 = por %p191, %p192
      %p194 = scmp.ne.s32.totalorder %s183, %s186
      %p195 = scmp.eq.s32.totalorder %s26, 1
      %p196 = por %p194, %p195
      %p197 = scmp.ne.s32.totalorder %s186, %s187
      %p198 = scmp.eq.s32.totalorder %s26, 0
      %p199 = por %p197, %p198
      %p200 = scmp.ne.s32.totalorder %s186, %s187
      %p201 = scmp.eq.s32.totalorder %s27, 1
      %p202 = por %p200, %p201
      %p204 = scmp.ne.s32.totalorder %s187, %s203
      %p205 = scmp.eq.s32.totalorder %s27, 0
      %p206 = por %p204, %p205
      %p207 = scmp.le.s32.totalorder 1, %s21
      %p208 = scmp.lt.s32.totalorder %s21, 3
      %p209 = pnand %p207, %p208
      %p210 = pneg %p209
      // Predicated region
      $region9: #{tpu_custom_call.1} parent=5 // pred_check
        _
      $region10: #{tpu_custom_call.1} parent=5 // pred_check_branch
        %212 = sbr.rel (%p209) target = $region12
      $region11: #{tpu_custom_call.1} parent=5 // pred_region
        %s213 = ssub.s32 %s21, 1
        // Predicated region
        $region13: #{tpu_custom_call.1} parent=11 // pred_check
          %p214 = pneg %p68
        $region14: #{tpu_custom_call.1} parent=11 // pred_check_branch
          %216 = sbr.rel (%p214) target = $region16
        $region15: #{tpu_custom_call.1} parent=11 // pred_region
          %s218 = ssub.s32 2048, 2048
          %219 = vsyncadd [#allocation6], %s218
          %s220 = sshll.u32 [#allocation5], 4
          %s221 = int_to_ptr.vmem [resolvable:$true] %s220
          %226 = dma.hbm_to_vmem [thread:$0]  %s1, 2048, %s221, [#allocation6], 128, 128, 8
        $region16: #{tpu_custom_call.1} parent=11 // pred_fallthru
          _
        // Predicated region
        $region17: #{tpu_custom_call.1} parent=11 // pred_check
          %p227 = pneg %p89
        $region18: #{tpu_custom_call.1} parent=11 // pred_check_branch
          %229 = sbr.rel (%p227) target = $region20
        $region19: #{tpu_custom_call.1} parent=11 // pred_region
          _
        $region20: #{tpu_custom_call.1} parent=11 // pred_fallthru
          _
        // Predicated region
        $region21: #{tpu_custom_call.1} parent=11 // pred_check
          %p230 = pneg %p110
        $region22: #{tpu_custom_call.1} parent=11 // pred_check_branch
          %232 = sbr.rel (%p230) target = $region24
        $region23: #{tpu_custom_call.1} parent=11 // pred_region
          %s234 = ssub.s32 1024, 1024
          %235 = vsyncadd [#allocation6], %s234
          %s236 = sshll.u32 [#allocation7], 4
          %s237 = int_to_ptr.vmem [resolvable:$true] %s236
          %242 = dma.hbm_to_vmem [thread:$0]  %s3, 1024, %s237, [#allocation6], 64, 64, 4
        $region24: #{tpu_custom_call.1} parent=11 // pred_fallthru
          _
        // Predicated region
        $region25: #{tpu_custom_call.1} parent=11 // pred_check
          %p243 = pneg %p131
        $region26: #{tpu_custom_call.1} parent=11 // pred_check_branch
          %245 = sbr.rel (%p243) target = $region28
        $region27: #{tpu_custom_call.1} parent=11 // pred_region
          _
        $region28: #{tpu_custom_call.1} parent=11 // pred_fallthru
          _
        // Predicated region
        $region29: #{tpu_custom_call.1} parent=11 // pred_check
          %p246 = pneg %p152
        $region30: #{tpu_custom_call.1} parent=11 // pred_check_branch
          %248 = sbr.rel (%p246) target = $region32
        $region31: #{tpu_custom_call.1} parent=11 // pred_region
          %s250 = ssub.s32 1024, 1024
          %251 = vsyncadd [#allocation9], %s250
          %s252 = sshll.u32 [#allocation8], 4
          %s253 = int_to_ptr.vmem [resolvable:$true] %s252
          %258 = dma.hbm_to_vmem [thread:$0]  %s5, 1024, %s253, [#allocation9], 64, 64, 4
        $region32: #{tpu_custom_call.1} parent=11 // pred_fallthru
          _
        // Predicated region
        $region33: #{tpu_custom_call.1} parent=11 // pred_check
          %p259 = pneg %p173
        $region34: #{tpu_custom_call.1} parent=11 // pred_check_branch
          %261 = sbr.rel (%p259) target = $region36
        $region35: #{tpu_custom_call.1} parent=11 // pred_region
          _
        $region36: #{tpu_custom_call.1} parent=11 // pred_fallthru
          _
      $region12: #{tpu_custom_call.1} parent=5 // pred_fallthru
        _
      %p262 = scmp.lt.s32.totalorder %s21, 2
      // Predicated region
      $region37: #{tpu_custom_call.1} parent=5 // pred_check
        %p263 = pneg %p262
      $region38: #{tpu_custom_call.1} parent=5 // pred_check_branch
        %265 = sbr.rel (%p263) target = $region40
      $region39: #{tpu_custom_call.1} parent=5 // pred_region
        // Predicated region
        $region41: #{tpu_custom_call.1} parent=39 // pred_check
          %p266 = pneg %p41
        $region42: #{tpu_custom_call.1} parent=39 // pred_check_branch
          %268 = sbr.rel (%p266) target = $region44
        $region43: #{tpu_custom_call.1} parent=39 // pred_region
          %s269 = sand.u32 %s31, 1
          %s270 = scalar_lea.sflag [#allocation3], %s269
          %s271 = sand.u32 %s31, 1
          %s272 = smul.addr %s271, 16
          %s273 = scalar_lea.vmem [#allocation2], %s272
          %s274 = smul.u32 4, %s21
          %s276 = ssub.s32 256, 256
          %277 = vsyncadd %s270, %s276
          %s278 = smul.addr %s274, 64
          %s279 = scalar_lea.hbm %s0, %s278
          %s280 = sshll.u32 %s273, 4
          %s281 = int_to_ptr.vmem [resolvable:$true] %s280
          %286 = dma.hbm_to_vmem [thread:$0]  %s279, 256, %s281, %s270, 64, 64, 4
        $region44: #{tpu_custom_call.1} parent=39 // pred_fallthru
          _
      $region40: #{tpu_custom_call.1} parent=5 // pred_fallthru
        _
      %p287 = scmp.le.s32.totalorder 1, %s21
      %p288 = scmp.lt.s32.totalorder %s21, 3
      %p289 = pnand %p287, %p288
      %p290 = pneg %p289
      // Predicated region
      $region45: #{tpu_custom_call.1} parent=5 // pred_check
        _
      $region46: #{tpu_custom_call.1} parent=5 // pred_check_branch
        %292 = sbr.rel (%p289) target = $region48
      $region47: #{tpu_custom_call.1} parent=5 // pred_region
        %s293 = ssub.s32 %s21, 1
        %s294 = sand.u32 %s34, 1
        %s295 = scalar_lea.sflag [#allocation3], %s294
        %s296 = sand.u32 %s34, 1
        %s297 = smul.addr %s296, 16
        %s298 = scalar_lea.vmem [#allocation2], %s297
        // Predicated region
        $region49: #{tpu_custom_call.1} parent=47 // pred_check
          %p299 = pneg %p47
        $region50: #{tpu_custom_call.1} parent=47 // pred_check_branch
          %301 = sbr.rel (%p299) target = $region52
        $region51: #{tpu_custom_call.1} parent=47 // pred_region
          %302 = dma.done %s295, 256
        $region52: #{tpu_custom_call.1} parent=47 // pred_fallthru
          _
        // Predicated region
        $region53: #{tpu_custom_call.1} parent=47 // pred_check
          %p303 = pneg %p68
        $region54: #{tpu_custom_call.1} parent=47 // pred_check_branch
          %305 = sbr.rel (%p303) target = $region56
        $region55: #{tpu_custom_call.1} parent=47 // pred_region
          %306 = dma.done [#allocation6], 2048
        $region56: #{tpu_custom_call.1} parent=47 // pred_fallthru
          _
        // Predicated region
        $region57: #{tpu_custom_call.1} parent=47 // pred_check
          %p307 = pneg %p110
        $region58: #{tpu_custom_call.1} parent=47 // pred_check_branch
          %309 = sbr.rel (%p307) target = $region60
        $region59: #{tpu_custom_call.1} parent=47 // pred_region
          %310 = dma.done [#allocation6], 1024
        $region60: #{tpu_custom_call.1} parent=47 // pred_fallthru
          _
        // Predicated region
        $region61: #{tpu_custom_call.1} parent=47 // pred_check
          %p311 = pneg %p152
        $region62: #{tpu_custom_call.1} parent=47 // pred_check_branch
          %313 = sbr.rel (%p311) target = $region64
        $region63: #{tpu_custom_call.1} parent=47 // pred_region
          %314 = dma.done [#allocation9], 1024
        $region64: #{tpu_custom_call.1} parent=47 // pred_fallthru
          _
        %s315 = sand.u32 %s34, 1
        %s316 = scalar_lea.sflag [#allocation3], %s315
        %s317 = sand.u32 %s34, 1
        %s318 = smul.addr %s317, 16
        %s319 = scalar_lea.vmem [#allocation2], %s318
        %p320 = pneg %p47
        %p321 = pneg %p44
        %p322 = pneg %p68
        %p323 = pneg %p65
        %p324 = pneg %p89
        %p325 = pneg %p86
        %p326 = pneg %p110
        %p327 = pneg %p107
        %p328 = pneg %p131
        %p329 = pneg %p128
        %p330 = pneg %p152
        %p331 = pneg %p149
        %p332 = pneg %p173
        %p333 = pneg %p170
        %p334 = pneg %p199
        %p335 = pneg %p196
        %s336 = sand.u32 %s186, 1
        %s337 = scalar_lea.sflag [#allocation4], %s336
        %s338 = sand.u32 %s186, 1
        %s339 = smul.addr %s338, 32
        %s340 = scalar_lea.vmem [#allocation10], %s339
        %s341 = smul.u32 4, %s26
        %s342 = smul.u32 4, %s26
        %v344 = vld [vmem:[%s298] sm:$0xf]
        %v345 = vld [vmem:[%s298 + $0x4] sm:$0xf]
        %v346 = vld [vmem:[%s298 + $0x8] sm:$0xf]
        %v347 = vld [vmem:[%s298 + $0xc] sm:$0xf]
        %v348 = vld [vmem:[#allocation5] sm:$0xff]
        %v349 = vld [vmem:[#allocation5 + $0x8] sm:$0xff]
        %v350 = vld [vmem:[#allocation5 + $0x10] sm:$0xff]
        %v351 = vld [vmem:[#allocation5 + $0x18] sm:$0xff]
        %v352 = vld [vmem:[#allocation5 + $0x20] sm:$0xff]
        %v353 = vld [vmem:[#allocation5 + $0x28] sm:$0xff]
        %v354 = vld [vmem:[#allocation5 + $0x30] sm:$0xff]
        %v355 = vld [vmem:[#allocation5 + $0x38] sm:$0xff]
        %v356 = vld [vmem:[#allocation5 + $0x40] sm:$0xff]
        %v357 = vld [vmem:[#allocation5 + $0x48] sm:$0xff]
        %v358 = vld [vmem:[#allocation5 + $0x50] sm:$0xff]
        %v359 = vld [vmem:[#allocation5 + $0x58] sm:$0xff]
        %v360 = vld [vmem:[#allocation5 + $0x60] sm:$0xff]
        %v361 = vld [vmem:[#allocation5 + $0x68] sm:$0xff]
        %v362 = vld [vmem:[#allocation5 + $0x70] sm:$0xff]
        %v363 = vld [vmem:[#allocation5 + $0x78] sm:$0xff]
        %v364 = vld [vmem:[%s2] sm:$0x3]
        %v366 = vlaneseq
        %v367 = vshrl.u32 %v366, 7
        %v368 = vsub.s32 0, %v367
        %v369 = vrot.slane %v364, %v368
        %v370 = vlaneseq
        %v371 = vshrl.u32 %v370, 7
        %v372 = vsub.s32 1, %v371
        %v373 = vrot.slane %v364, %v372
        %v380 = vunpack.c.l.b16 %v344
        %v381 = vunpack.c.l.b16 %v345
        %v382 = vunpack.c.l.b16 %v346
        %v383 = vunpack.c.l.b16 %v347
        %v384 = vpack.c.b16 %v381, %v380
        %v385 = vpack.c.b16 %v383, %v382
        %v404 = vunpack.c.l.b16 %v348
        %v405 = vunpack.c.h.b16 %v348
        %v406 = vunpack.c.l.b16 %v349
        %v407 = vunpack.c.h.b16 %v349
        %v408 = vunpack.c.l.b16 %v350
        %v409 = vunpack.c.h.b16 %v350
        %v410 = vunpack.c.l.b16 %v351
        %v411 = vunpack.c.h.b16 %v351
        %v412 = vunpack.c.l.b16 %v352
        %v413 = vunpack.c.h.b16 %v352
        %v414 = vunpack.c.l.b16 %v353
        %v415 = vunpack.c.h.b16 %v353
        %v416 = vunpack.c.l.b16 %v354
        %v417 = vunpack.c.h.b16 %v354
        %v418 = vunpack.c.l.b16 %v355
        %v419 = vunpack.c.h.b16 %v355
        %v420 = vunpack.c.l.b16 %v356
        %v421 = vunpack.c.h.b16 %v356
        %v422 = vunpack.c.l.b16 %v357
        %v423 = vunpack.c.h.b16 %v357
        %v424 = vunpack.c.l.b16 %v358
        %v425 = vunpack.c.h.b16 %v358
        %v426 = vunpack.c.l.b16 %v359
        %v427 = vunpack.c.h.b16 %v359
        %v428 = vunpack.c.l.b16 %v360
        %v429 = vunpack.c.h.b16 %v360
        %v430 = vunpack.c.l.b16 %v361
        %v431 = vunpack.c.h.b16 %v361
        %v432 = vunpack.c.l.b16 %v362
        %v433 = vunpack.c.h.b16 %v362
        %v434 = vunpack.c.l.b16 %v363
        %v435 = vunpack.c.h.b16 %v363
        %v436 = vpack.c.b16 %v406, %v404
        %v437 = vpack.c.b16 %v407, %v405
        %v438 = vpack.c.b16 %v410, %v408
        %v439 = vpack.c.b16 %v411, %v409
        %v440 = vpack.c.b16 %v414, %v412
        %v441 = vpack.c.b16 %v415, %v413
        %v442 = vpack.c.b16 %v418, %v416
        %v443 = vpack.c.b16 %v419, %v417
        %v444 = vpack.c.b16 %v422, %v420
        %v445 = vpack.c.b16 %v423, %v421
        %v446 = vpack.c.b16 %v426, %v424
        %v447 = vpack.c.b16 %v427, %v425
        %v448 = vpack.c.b16 %v430, %v428
        %v449 = vpack.c.b16 %v431, %v429
        %v450 = vpack.c.b16 %v434, %v432
        %v451 = vpack.c.b16 %v435, %v433
        %468 = vmatprep.subr.bf16.mxu0 %v437
        %469 = vmatpush1.bf16.msra.mxu0 %v436
        %470 = vmatprep.subr.bf16.mxu0 %v439
        %471 = vmatpush1.bf16.msra.mxu0 %v438
        %472 = vmatprep.subr.bf16.mxu0 %v441
        %473 = vmatpush1.bf16.msra.mxu0 %v440
        %474 = vmatprep.subr.bf16.mxu0 %v443
        %475 = vmatpush1.bf16.msra.mxu0 %v442
        %476 = vmatprep.subr.bf16.mxu0 %v445
        %477 = vmatpush1.bf16.msra.mxu0 %v444
        %478 = vmatprep.subr.bf16.mxu0 %v447
        %479 = vmatpush1.bf16.msra.mxu0 %v446
        %480 = vmatprep.subr.bf16.mxu0 %v449
        %481 = vmatpush1.bf16.msra.mxu0 %v448
        %482 = vmatprep.subr.bf16.mxu0 %v451
        %483 = vmatpush1.bf16.msra.mxu0 %v450
        %484 = vmatprep.subr.bf16.mxu0 0
        %485 = vmatpush1.bf16.msra.mxu0 0
        %486 = vmatprep.subr.bf16.mxu0 0
        %487 = vmatpush1.bf16.msra.mxu0 0
        %488 = vmatprep.subr.bf16.mxu0 0
        %489 = vmatpush1.bf16.msra.mxu0 0
        %490 = vmatprep.subr.bf16.mxu0 0
        %491 = vmatpush1.bf16.msra.mxu0 0
        %492 = vmatprep.subr.bf16.mxu0 0
        %493 = vmatpush1.bf16.msra.mxu0 0
        %494 = vmatprep.subr.bf16.mxu0 0
        %495 = vmatpush1.bf16.msra.mxu0 0
        %496 = vmatprep.subr.bf16.mxu0 0
        %497 = vmatpush1.bf16.msra.mxu0 0
        %498 = vmatprep.subr.bf16.mxu0 0
        %499 = vmatpush1.bf16.msra.mxu0 0
        %500 = vmatprep.mubr.bf16.mxu0 0
        %501 = vmatmul.mubr.bf16.gmra.mrb[0].mxu0 %v384
        %v502 = vpop.f32.mrb[0].mxu0
        %v503 = vadd.f32 %v369, %v502
        %v504 = vpop.f32.mrb[0].mxu0
        %v505 = vadd.f32 %v373, %v504
        %v506 = vpop.f32.mrb[0].mxu0
        %v507 = vadd.f32 %v369, %v506
        %v508 = vpop.f32.mrb[0].mxu0
        %v509 = vadd.f32 %v373, %v508
        %510 = vmatprep.mubr.bf16.mxu0 0
        %511 = vmatmul.mubr.bf16.gmra.mrb[0].mxu0 %v385
        %v512 = vpop.f32.mrb[0].mxu0
        %v513 = vadd.f32 %v369, %v512
        %v514 = vpop.f32.mrb[0].mxu0
        %v515 = vadd.f32 %v373, %v514
        %v516 = vpop.f32.mrb[0].mxu0
        %v517 = vadd.f32 %v369, %v516
        %v518 = vpop.f32.mrb[0].mxu0
        %v519 = vadd.f32 %v373, %v518
        %520 = vdwg.mxu0
        %v521 = vmax.f32 %v503, 0.0
        %v522 = vmax.f32 %v507, 0.0
        %v523 = vmax.f32 %v513, 0.0
        %v524 = vmax.f32 %v517, 0.0
        %v525 = vpack.c.bf16 %v522, %v521
        %v526 = vpack.c.bf16 %v524, %v523
        %v527 = vld [vmem:[#allocation7] sm:$0xf]
        %v528 = vld [vmem:[#allocation7 + $0x4] sm:$0xf]
        %v529 = vld [vmem:[#allocation7 + $0x8] sm:$0xf]
        %v530 = vld [vmem:[#allocation7 + $0xc] sm:$0xf]
        %v531 = vld [vmem:[#allocation7 + $0x10] sm:$0xf]
        %v532 = vld [vmem:[#allocation7 + $0x14] sm:$0xf]
        %v533 = vld [vmem:[#allocation7 + $0x18] sm:$0xf]
        %v534 = vld [vmem:[#allocation7 + $0x1c] sm:$0xf]
        %v535 = vld [vmem:[#allocation7 + $0x20] sm:$0xf]
        %v536 = vld [vmem:[#allocation7 + $0x24] sm:$0xf]
        %v537 = vld [vmem:[#allocation7 + $0x28] sm:$0xf]
        %v538 = vld [vmem:[#allocation7 + $0x2c] sm:$0xf]
        %v539 = vld [vmem:[#allocation7 + $0x30] sm:$0xf]
        %v540 = vld [vmem:[#allocation7 + $0x34] sm:$0xf]
        %v541 = vld [vmem:[#allocation7 + $0x38] sm:$0xf]
        %v542 = vld [vmem:[#allocation7 + $0x3c] sm:$0xf]
        %v543 = vld [vmem:[%s4] sm:$0x1]
        %v545 = vlaneseq
        %v546 = vshrl.u32 %v545, 7
        %v547 = vsub.s32 0, %v546
        %v548 = vrot.slane %v543, %v547
        %v566 = vunpack.c.l.b16 %v527
        %v567 = vunpack.c.l.b16 %v528
        %v568 = vunpack.c.l.b16 %v529
        %v569 = vunpack.c.l.b16 %v530
        %v570 = vunpack.c.l.b16 %v531
        %v571 = vunpack.c.l.b16 %v532
        %v572 = vunpack.c.l.b16 %v533
        %v573 = vunpack.c.l.b16 %v534
        %v574 = vunpack.c.l.b16 %v535
        %v575 = vunpack.c.l.b16 %v536
        %v576 = vunpack.c.l.b16 %v537
        %v577 = vunpack.c.l.b16 %v538
        %v578 = vunpack.c.l.b16 %v539
        %v579 = vunpack.c.l.b16 %v540
        %v580 = vunpack.c.l.b16 %v541
        %v581 = vunpack.c.l.b16 %v542
        %v582 = vpack.c.b16 %v567, %v566
        %v583 = vpack.c.b16 %v569, %v568
        %v584 = vpack.c.b16 %v571, %v570
        %v585 = vpack.c.b16 %v573, %v572
        %v586 = vpack.c.b16 %v575, %v574
        %v587 = vpack.c.b16 %v577, %v576
        %v588 = vpack.c.b16 %v579, %v578
        %v589 = vpack.c.b16 %v581, %v580
        %598 = vmatprep.subr.bf16.mxu0 0
        %599 = vmatpush1.bf16.msra.mxu0 %v582
        %600 = vmatprep.subr.bf16.mxu0 0
        %601 = vmatpush1.bf16.msra.mxu0 %v583
        %602 = vmatprep.subr.bf16.mxu0 0
        %603 = vmatpush1.bf16.msra.mxu0 %v584
        %604 = vmatprep.subr.bf16.mxu0 0
        %605 = vmatpush1.bf16.msra.mxu0 %v585
        %606 = vmatprep.subr.bf16.mxu0 0
        %607 = vmatpush1.bf16.msra.mxu0 %v586
        %608 = vmatprep.subr.bf16.mxu0 0
        %609 = vmatpush1.bf16.msra.mxu0 %v587
        %610 = vmatprep.subr.bf16.mxu0 0
        %611 = vmatpush1.bf16.msra.mxu0 %v588
        %612 = vmatprep.subr.bf16.mxu0 0
        %613 = vmatpush1.bf16.msra.mxu0 %v589
        %614 = vmatprep.subr.bf16.mxu0 0
        %615 = vmatpush1.bf16.msra.mxu0 0
        %616 = vmatprep.subr.bf16.mxu0 0
        %617 = vmatpush1.bf16.msra.mxu0 0
        %618 = vmatprep.subr.bf16.mxu0 0
        %619 = vmatpush1.bf16.msra.mxu0 0
        %620 = vmatprep.subr.bf16.mxu0 0
        %621 = vmatpush1.bf16.msra.mxu0 0
        %622 = vmatprep.subr.bf16.mxu0 0
        %623 = vmatpush1.bf16.msra.mxu0 0
        %624 = vmatprep.subr.bf16.mxu0 0
        %625 = vmatpush1.bf16.msra.mxu0 0
        %626 = vmatprep.subr.bf16.mxu0 0
        %627 = vmatpush1.bf16.msra.mxu0 0
        %628 = vmatprep.subr.bf16.mxu0 0
        %629 = vmatpush1.bf16.msra.mxu0 0
        %630 = vmatprep.mubr.bf16.mxu0 0
        %631 = vmatmul.mubr.bf16.gmra.mrb[0].mxu0 %v525
        %v632 = vpop.f32.mrb[0].mxu0
        %v633 = vadd.f32 %v548, %v632
        %v634 = vpop.f32.mrb[0].mxu0
        %v635 = vpop.f32.mrb[0].mxu0
        %v636 = vadd.f32 %v548, %v635
        %v637 = vpop.f32.mrb[0].mxu0
        %638 = vmatprep.mubr.bf16.mxu0 0
        %639 = vmatmul.mubr.bf16.gmra.mrb[0].mxu0 %v526
        %v640 = vpop.f32.mrb[0].mxu0
        %v641 = vadd.f32 %v548, %v640
        %v642 = vpop.f32.mrb[0].mxu0
        %v643 = vpop.f32.mrb[0].mxu0
        %v644 = vadd.f32 %v548, %v643
        %v645 = vpop.f32.mrb[0].mxu0
        %646 = vdwg.mxu0
        %v647 = vmax.f32 %v633, 0.0
        %v648 = vmax.f32 %v636, 0.0
        %v649 = vmax.f32 %v641, 0.0
        %v650 = vmax.f32 %v644, 0.0
        %v651 = vpack.c.bf16 %v648, %v647
        %v652 = vpack.c.bf16 %v650, %v649
        %v653 = vld [vmem:[#allocation8] sm:$0xf]
        %v654 = vld [vmem:[#allocation8 + $0x4] sm:$0xf]
        %v655 = vld [vmem:[#allocation8 + $0x8] sm:$0xf]
        %v656 = vld [vmem:[#allocation8 + $0xc] sm:$0xf]
        %v657 = vld [vmem:[#allocation8 + $0x10] sm:$0xf]
        %v658 = vld [vmem:[#allocation8 + $0x14] sm:$0xf]
        %v659 = vld [vmem:[#allocation8 + $0x18] sm:$0xf]
        %v660 = vld [vmem:[#allocation8 + $0x1c] sm:$0xf]
        %v661 = vld [vmem:[#allocation8 + $0x20] sm:$0xf]
        %v662 = vld [vmem:[#allocation8 + $0x24] sm:$0xf]
        %v663 = vld [vmem:[#allocation8 + $0x28] sm:$0xf]
        %v664 = vld [vmem:[#allocation8 + $0x2c] sm:$0xf]
        %v665 = vld [vmem:[#allocation8 + $0x30] sm:$0xf]
        %v666 = vld [vmem:[#allocation8 + $0x34] sm:$0xf]
        %v667 = vld [vmem:[#allocation8 + $0x38] sm:$0xf]
        %v668 = vld [vmem:[#allocation8 + $0x3c] sm:$0xf]
        %v669 = vld [vmem:[%s6] sm:$0x1]
        %v671 = vlaneseq
        %v672 = vshrl.u32 %v671, 7
        %v673 = vsub.s32 0, %v672
        %v674 = vrot.slane %v669, %v673
        %v692 = vunpack.c.l.b16 %v653
        %v693 = vunpack.c.l.b16 %v654
        %v694 = vunpack.c.l.b16 %v655
        %v695 = vunpack.c.l.b16 %v656
        %v696 = vunpack.c.l.b16 %v657
        %v697 = vunpack.c.l.b16 %v658
        %v698 = vunpack.c.l.b16 %v659
        %v699 = vunpack.c.l.b16 %v660
        %v700 = vunpack.c.l.b16 %v661
        %v701 = vunpack.c.l.b16 %v662
        %v702 = vunpack.c.l.b16 %v663
        %v703 = vunpack.c.l.b16 %v664
        %v704 = vunpack.c.l.b16 %v665
        %v705 = vunpack.c.l.b16 %v666
        %v706 = vunpack.c.l.b16 %v667
        %v707 = vunpack.c.l.b16 %v668
        %v708 = vpack.c.b16 %v693, %v692
        %v709 = vpack.c.b16 %v695, %v694
        %v710 = vpack.c.b16 %v697, %v696
        %v711 = vpack.c.b16 %v699, %v698
        %v712 = vpack.c.b16 %v701, %v700
        %v713 = vpack.c.b16 %v703, %v702
        %v714 = vpack.c.b16 %v705, %v704
        %v715 = vpack.c.b16 %v707, %v706
        %724 = vmatprep.subr.bf16.mxu0 0
        %725 = vmatpush1.bf16.msra.mxu0 %v708
        %726 = vmatprep.subr.bf16.mxu0 0
        %727 = vmatpush1.bf16.msra.mxu0 %v709
        %728 = vmatprep.subr.bf16.mxu0 0
        %729 = vmatpush1.bf16.msra.mxu0 %v710
        %730 = vmatprep.subr.bf16.mxu0 0
        %731 = vmatpush1.bf16.msra.mxu0 %v711
        %732 = vmatprep.subr.bf16.mxu0 0
        %733 = vmatpush1.bf16.msra.mxu0 %v712
        %734 = vmatprep.subr.bf16.mxu0 0
        %735 = vmatpush1.bf16.msra.mxu0 %v713
        %736 = vmatprep.subr.bf16.mxu0 0
        %737 = vmatpush1.bf16.msra.mxu0 %v714
        %738 = vmatprep.subr.bf16.mxu0 0
        %739 = vmatpush1.bf16.msra.mxu0 %v715
        %740 = vmatprep.subr.bf16.mxu0 0
        %741 = vmatpush1.bf16.msra.mxu0 0
        %742 = vmatprep.subr.bf16.mxu0 0
        %743 = vmatpush1.bf16.msra.mxu0 0
        %744 = vmatprep.subr.bf16.mxu0 0
        %745 = vmatpush1.bf16.msra.mxu0 0
        %746 = vmatprep.subr.bf16.mxu0 0
        %747 = vmatpush1.bf16.msra.mxu0 0
        %748 = vmatprep.subr.bf16.mxu0 0
        %749 = vmatpush1.bf16.msra.mxu0 0
        %750 = vmatprep.subr.bf16.mxu0 0
        %751 = vmatpush1.bf16.msra.mxu0 0
        %752 = vmatprep.subr.bf16.mxu0 0
        %753 = vmatpush1.bf16.msra.mxu0 0
        %754 = vmatprep.subr.bf16.mxu0 0
        %755 = vmatpush1.bf16.msra.mxu0 0
        %756 = vmatprep.mubr.bf16.mxu0 0
        %757 = vmatmul.mubr.bf16.gmra.mrb[0].mxu0 %v651
        %v758 = vpop.f32.mrb[0].mxu0
        %v759 = vadd.f32 %v674, %v758
        %v760 = vpop.f32.mrb[0].mxu0
        %v761 = vpop.f32.mrb[0].mxu0
        %v762 = vadd.f32 %v674, %v761
        %v763 = vpop.f32.mrb[0].mxu0
        %764 = vmatprep.mubr.bf16.mxu0 0
        %765 = vmatmul.mubr.bf16.gmra.mrb[0].mxu0 %v652
        %v766 = vpop.f32.mrb[0].mxu0
        %v767 = vadd.f32 %v674, %v766
        %v768 = vpop.f32.mrb[0].mxu0
        %v769 = vpop.f32.mrb[0].mxu0
        %v770 = vadd.f32 %v674, %v769
        %v771 = vpop.f32.mrb[0].mxu0
        %772 = vdwg.mxu0
        %v773 = vmax.f32 %v759, 0.0
        %v774 = vmax.f32 %v762, 0.0
        %v775 = vmax.f32 %v767, 0.0
        %v776 = vmax.f32 %v770, 0.0
        %v777 = vadd.f32 %v773, %v505
        %v778 = vadd.f32 %v774, %v509
        %v779 = vadd.f32 %v775, %v515
        %v780 = vadd.f32 %v776, %v519
        %781 = vst [vmem:[%s340] sm:$0xff] %v777
        %782 = vst [vmem:[%s340 + $0x8] sm:$0xff] %v778
        %783 = vst [vmem:[%s340 + $0x10] sm:$0xff] %v779
        %784 = vst [vmem:[%s340 + $0x18] sm:$0xff] %v780
        %s785 = sand.u32 %s186, 1
        %s786 = scalar_lea.sflag [#allocation4], %s785
        %s787 = sand.u32 %s186, 1
        %s788 = smul.addr %s787, 32
        %s789 = scalar_lea.vmem [#allocation10], %s788
        // Predicated region
        $region65: #{tpu_custom_call.1} parent=47 // pred_check
          %p790 = pneg %p196
        $region66: #{tpu_custom_call.1} parent=47 // pred_check_branch
          %792 = sbr.rel (%p790) target = $region68
        $region67: #{tpu_custom_call.1} parent=47 // pred_region
          %s793 = smul.u32 4, %s26
          %s795 = ssub.s32 512, 512
          %796 = vsyncadd %s786, %s795
          %s797 = smul.addr %s793, 128
          %s798 = scalar_lea.hbm %s7, %s797
          %s799 = sshll.u32 %s789, 4
          %s800 = int_to_ptr.vmem [resolvable:$true] %s799
          %805 = dma.vmem_to_hbm [thread:$0]  %s800, 512, %s798, %s786, 128, 128, 8
        $region68: #{tpu_custom_call.1} parent=47 // pred_fallthru
          _
      $region48: #{tpu_custom_call.1} parent=5 // pred_fallthru
        _
      %p806 = scmp.le.s32.totalorder 2, %s21
      // Predicated region
      $region69: #{tpu_custom_call.1} parent=5 // pred_check
        %p807 = pneg %p806
      $region70: #{tpu_custom_call.1} parent=5 // pred_check_branch
        %809 = sbr.rel (%p807) target = $region72
      $region71: #{tpu_custom_call.1} parent=5 // pred_region
        %s810 = ssub.s32 %s21, 2
        // Predicated region
        $region73: #{tpu_custom_call.1} parent=71 // pred_check
          %p811 = pneg %p202
        $region74: #{tpu_custom_call.1} parent=71 // pred_check_branch
          %813 = sbr.rel (%p811) target = $region76
        $region75: #{tpu_custom_call.1} parent=71 // pred_region
          %s814 = sand.u32 %s187, 1
          %s815 = scalar_lea.sflag [#allocation4], %s814
          %s816 = sand.u32 %s187, 1
          %s817 = smul.addr %s816, 32
          %s818 = scalar_lea.vmem [#allocation10], %s817
          %819 = dma.done %s815, 512
        $region76: #{tpu_custom_call.1} parent=71 // pred_fallthru
          _
      $region72: #{tpu_custom_call.1} parent=5 // pred_fallthru
        _
    $region6: #{tpu_custom_call.1} parent=1 // loop_footer
      %s25 = sadd.s32 1, %s21
    $region7: #{tpu_custom_call.1} parent=1 // loop_footer_branch
      %20 = sbr.rel target = $region3
    $region8: #{tpu_custom_call.1} parent=1 // loop_exit
      _
    %820 = vsyncpa [#allocation3], 1
    %s821 = scalar_lea.sflag [#allocation3], 1
    %822 = vsyncpa %s821, 1
    %823 = vsyncpa [#allocation6], 1
    %824 = vsyncpa [#allocation9], 1
    %825 = vsyncpa [#allocation4], 1
    %s826 = scalar_lea.sflag [#allocation4], 1
    %827 = vsyncpa %s826, 1

// kernel: tpu_custom_call.1
$region0: #{tpu_custom_call.1}
  #allocation0 [shape = 'u32[]', space=smem, size = 0x4, offset = 0x4, fixed_abs, tag = 'smem constant byte address 0x4 - core index']
  #allocation1 [shape = 'u32[144,128]{1,0:T(1,128)}', space=vmem, size = 0x12000, scoped, tag = 'internal scratch']
  %s0 = inlined_call_operand.hbm [shape: bf16[64,128], index: 0, kind: input, shape index: {}]
  %s1 = inlined_call_operand.hbm [shape: bf16[128,256], index: 1, kind: input, shape index: {}]
  %s2 = inlined_call_operand.vmem [shape: f32[1,256], index: 2, kind: input, shape index: {}]
  %s3 = inlined_call_operand.hbm [shape: bf16[128,128], index: 3, kind: input, shape index: {}]
  %s4 = inlined_call_operand.vmem [shape: f32[1,128], index: 4, kind: input, shape index: {}]
  %s5 = inlined_call_operand.hbm [shape: bf16[128,128], index: 5, kind: input, shape index: {}]
  %s6 = inlined_call_operand.vmem [shape: f32[1,128], index: 6, kind: input, shape index: {}]
  %s7 = inlined_call_operand.hbm [shape: f32[64,128], index: 7, kind: output, shape index: {}]
  %s8 = sld [smem:[#allocation0]]
  $region77: #{tpu_custom_call.1} parent=0
    _
  %s10 = ssub.s32 1, %s8
  %s11 = scalar_select 0, %s10, %s8
  $region1: #{tpu_custom_call.1} parent=0
    #allocation2 [shape = 'u8[16384]{0}', space=vmem, size = 0x4000, scoped, tag = 'input window, operand 0']
    #allocation3 [shape = 's32[2]{0}', space=sflag, size = 0x8, scoped, tag = 'scoped memory for tpu_custom_call.1']
    #allocation4 [shape = 's32[2]{0}', space=sflag, size = 0x8, scoped, tag = 'scoped memory for tpu_custom_call.1']
    #allocation5 [shape = 'u8[65536]{0}', space=vmem, size = 0x10000, scoped, tag = 'input window, operand 1, single buffered']
    #allocation6 [shape = 's32[1]{0}', space=sflag, size = 0x4, scoped, tag = 'scoped memory for tpu_custom_call.1']
    #allocation7 [shape = 'u8[32768]{0}', space=vmem, size = 0x8000, scoped, tag = 'input window, operand 3, single buffered']
    #allocation8 [shape = 'u8[32768]{0}', space=vmem, size = 0x8000, scoped, tag = 'input window, operand 5, single buffered']
    #allocation9 [shape = 's32[1]{0}', space=sflag, size = 0x4, scoped, tag = 'scoped memory for tpu_custom_call.1']
    #allocation10 [shape = 'u8[32768]{0}', space=vmem, size = 0x8000, scoped, tag = 'output window, operand 0']
    %12 = vsyncpa [#allocation3], 0
    %s13 = scalar_lea.sflag [#allocation3], 1
    %14 = vsyncpa %s13, 0
    %15 = vsyncpa [#allocation6], 0
    %16 = vsyncpa [#allocation9], 0
    %17 = vsyncpa [#allocation4], 0
    %s18 = scalar_lea.sflag [#allocation4], 1
    %19 = vsyncpa %s18, 0
    loop: start=0, step=1, limit=4
    $region2: #{tpu_custom_call.1} parent=1 // loop_pre_header
      _
    $region3: #{tpu_custom_call.1} parent=1 // loop_header
      %s21 = sphi 0, %s25
      %p22 = scmp.ge.s32.totalorder %s21, 4
      %s31 = sphi 0, %s33
      %s34 = sphi 0, %s31
      %s35 = sphi 0, %s34
      %s51 = sphi 0, %s35
      %s55 = sphi 0, %s55
      %s57 = sphi 0, %s55
      %s58 = sphi 0, %s57
      %s72 = sphi 0, %s58
      %s76 = sphi 0, %s76
      %s78 = sphi 0, %s76
      %s79 = sphi 0, %s78
      %s93 = sphi 0, %s79
      %s97 = sphi 0, %s97
      %s99 = sphi 0, %s97
      %s100 = sphi 0, %s99
      %s114 = sphi 0, %s100
      %s118 = sphi 0, %s118
      %s120 = sphi 0, %s118
      %s121 = sphi 0, %s120
      %s135 = sphi 0, %s121
      %s139 = sphi 0, %s139
      %s141 = sphi 0, %s139
      %s142 = sphi 0, %s141
      %s156 = sphi 0, %s142
      %s160 = sphi 0, %s160
      %s162 = sphi 0, %s160
      %s163 = sphi 0, %s162
      %s177 = sphi 0, %s163
      %s183 = sphi 0, %s185
      %s186 = sphi 0, %s183
      %s187 = sphi 0, %s186
      %s203 = sphi 0, %s187
    $region4: #{tpu_custom_call.1} parent=1 // loop_header_branch
      %24 = sbr.rel (%p22) target = $region8
    $region5: #{tpu_custom_call.1} parent=1 // loop_body
      %s26 = ssub.s32 %s21, 1
      %s27 = ssub.s32 %s21, 2
      %s28 = sadd.s32 %s21, 1
      %s29 = ssub.s32 %s21, %s28
      %p30 = scmp.eq.s32.totalorder %s29, 0
      %s32 = sadd.s32 %s31, 1
      %s33 = scalar_select %p30, %s31, %s32
      %p36 = pneg %p30
      %p37 = scmp.eq.s32.totalorder %s21, 1
      %p38 = por %p36, %p37
      %p39 = scmp.ne.s32.totalorder %s31, %s34
      %p40 = scmp.eq.s32.totalorder %s21, 0
      %p41 = por %p39, %p40
      %p42 = scmp.ne.s32.totalorder %s31, %s34
      %p43 = scmp.eq.s32.totalorder %s26, 1
      %p44 = por %p42, %p43
      %p45 = scmp.ne.s32.totalorder %s34, %s35
      %p46 = scmp.eq.s32.totalorder %s26, 0
      %p47 = por %p45, %p46
      %p48 = scmp.ne.s32.totalorder %s34, %s35
      %p49 = scmp.eq.s32.totalorder %s27, 1
      %p50 = por %p48, %p49
      %p52 = scmp.ne.s32.totalorder %s35, %s51
      %p53 = scmp.eq.s32.totalorder %s27, 0
      %p54 = por %p52, %p53
      %s56 = sadd.s32 %s55, 1
      %p59 = scmp.eq.s32.totalorder %s21, 1
      %p60 = scmp.ne.s32.totalorder %s55, %s57
      %p61 = scmp.eq.s32.totalorder %s21, 0
      %p62 = por %p60, %p61
      %p63 = scmp.ne.s32.totalorder %s55, %s57
      %p64 = scmp.eq.s32.totalorder %s26, 1
      %p65 = por %p63, %p64
      %p66 = scmp.ne.s32.totalorder %s57, %s58
      %p67 = scmp.eq.s32.totalorder %s26, 0
      %p68 = por %p66, %p67
      %p69 = scmp.ne.s32.totalorder %s57, %s58
      %p70 = scmp.eq.s32.totalorder %s27, 1
      %p71 = por %p69, %p70
      %p73 = scmp.ne.s32.totalorder %s58, %s72
      %p74 = scmp.eq.s32.totalorder %s27, 0
      %p75 = por %p73, %p74
      %s77 = sadd.s32 %s76, 1
      %p80 = scmp.eq.s32.totalorder %s21, 1
      %p81 = scmp.ne.s32.totalorder %s76, %s78
      %p82 = scmp.eq.s32.totalorder %s21, 0
      %p83 = por %p81, %p82
      %p84 = scmp.ne.s32.totalorder %s76, %s78
      %p85 = scmp.eq.s32.totalorder %s26, 1
      %p86 = por %p84, %p85
      %p87 = scmp.ne.s32.totalorder %s78, %s79
      %p88 = scmp.eq.s32.totalorder %s26, 0
      %p89 = por %p87, %p88
      %p90 = scmp.ne.s32.totalorder %s78, %s79
      %p91 = scmp.eq.s32.totalorder %s27, 1
      %p92 = por %p90, %p91
      %p94 = scmp.ne.s32.totalorder %s79, %s93
      %p95 = scmp.eq.s32.totalorder %s27, 0
      %p96 = por %p94, %p95
      %s98 = sadd.s32 %s97, 1
      %p101 = scmp.eq.s32.totalorder %s21, 1
      %p102 = scmp.ne.s32.totalorder %s97, %s99
      %p103 = scmp.eq.s32.totalorder %s21, 0
      %p104 = por %p102, %p103
      %p105 = scmp.ne.s32.totalorder %s97, %s99
      %p106 = scmp.eq.s32.totalorder %s26, 1
      %p107 = por %p105, %p106
      %p108 = scmp.ne.s32.totalorder %s99, %s100
      %p109 = scmp.eq.s32.totalorder %s26, 0
      %p110 = por %p108, %p109
      %p111 = scmp.ne.s32.totalorder %s99, %s100
      %p112 = scmp.eq.s32.totalorder %s27, 1
      %p113 = por %p111, %p112
      %p115 = scmp.ne.s32.totalorder %s100, %s114
      %p116 = scmp.eq.s32.totalorder %s27, 0
      %p117 = por %p115, %p116
      %s119 = sadd.s32 %s118, 1
      %p122 = scmp.eq.s32.totalorder %s21, 1
      %p123 = scmp.ne.s32.totalorder %s118, %s120
      %p124 = scmp.eq.s32.totalorder %s21, 0
      %p125 = por %p123, %p124
      %p126 = scmp.ne.s32.totalorder %s118, %s120
      %p127 = scmp.eq.s32.totalorder %s26, 1
      %p128 = por %p126, %p127
      %p129 = scmp.ne.s32.totalorder %s120, %s121
      %p130 = scmp.eq.s32.totalorder %s26, 0
      %p131 = por %p129, %p130
      %p132 = scmp.ne.s32.totalorder %s120, %s121
      %p133 = scmp.eq.s32.totalorder %s27, 1
      %p134 = por %p132, %p133
      %p136 = scmp.ne.s32.totalorder %s121, %s135
      %p137 = scmp.eq.s32.totalorder %s27, 0
      %p138 = por %p136, %p137
      %s140 = sadd.s32 %s139, 1
      %p143 = scmp.eq.s32.totalorder %s21, 1
      %p144 = scmp.ne.s32.totalorder %s139, %s141
      %p145 = scmp.eq.s32.totalorder %s21, 0
      %p146 = por %p144, %p145
      %p147 = scmp.ne.s32.totalorder %s139, %s141
      %p148 = scmp.eq.s32.totalorder %s26, 1
      %p149 = por %p147, %p148
      %p150 = scmp.ne.s32.totalorder %s141, %s142
      %p151 = scmp.eq.s32.totalorder %s26, 0
      %p152 = por %p150, %p151
      %p153 = scmp.ne.s32.totalorder %s141, %s142
      %p154 = scmp.eq.s32.totalorder %s27, 1
      %p155 = por %p153, %p154
      %p157 = scmp.ne.s32.totalorder %s142, %s156
      %p158 = scmp.eq.s32.totalorder %s27, 0
      %p159 = por %p157, %p158
      %s161 = sadd.s32 %s160, 1
      %p164 = scmp.eq.s32.totalorder %s21, 1
      %p165 = scmp.ne.s32.totalorder %s160, %s162
      %p166 = scmp.eq.s32.totalorder %s21, 0
      %p167 = por %p165, %p166
      %p168 = scmp.ne.s32.totalorder %s160, %s162
      %p169 = scmp.eq.s32.totalorder %s26, 1
      %p170 = por %p168, %p169
      %p171 = scmp.ne.s32.totalorder %s162, %s163
      %p172 = scmp.eq.s32.totalorder %s26, 0
      %p173 = por %p171, %p172
      %p174 = scmp.ne.s32.totalorder %s162, %s163
      %p175 = scmp.eq.s32.totalorder %s27, 1
      %p176 = por %p174, %p175
      %p178 = scmp.ne.s32.totalorder %s163, %s177
      %p179 = scmp.eq.s32.totalorder %s27, 0
      %p180 = por %p178, %p179
      %s181 = ssub.s32 %s21, %s28
      %p182 = scmp.eq.s32.totalorder %s181, 0
      %s184 = sadd.s32 %s183, 1
      %s185 = scalar_select %p182, %s183, %s184
      %p188 = pneg %p182
      %p189 = scmp.eq.s32.totalorder %s21, 1
      %p190 = por %p188, %p189
      %p191 = scmp.ne.s32.totalorder %s183, %s186
      %p192 = scmp.eq.s32.totalorder %s21, 0
      %p193 = por %p191, %p192
      %p194 = scmp.ne.s32.totalorder %s183, %s186
      %p195 = scmp.eq.s32.totalorder %s26, 1
      %p196 = por %p194, %p195
      %p197 = scmp.ne.s32.totalorder %s186, %s187
      %p198 = scmp.eq.s32.totalorder %s26, 0
      %p199 = por %p197, %p198
      %p200 = scmp.ne.s32.totalorder %s186, %s187
      %p201 = scmp.eq.s32.totalorder %s27, 1
      %p202 = por %p200, %p201
      %p204 = scmp.ne.s32.totalorder %s187, %s203
      %p205 = scmp.eq.s32.totalorder %s27, 0
      %p206 = por %p204, %p205
      %p207 = scmp.le.s32.totalorder 1, %s21
      %p208 = scmp.lt.s32.totalorder %s21, 3
      %p209 = pnand %p207, %p208
      %p210 = pneg %p209
      // Predicated region
      $region9: #{tpu_custom_call.1} parent=5 // pred_check
        _
      $region10: #{tpu_custom_call.1} parent=5 // pred_check_branch
        %212 = sbr.rel (%p209) target = $region12
      $region11: #{tpu_custom_call.1} parent=5 // pred_region
        %s213 = ssub.s32 %s21, 1
        // Predicated region
        $region13: #{tpu_custom_call.1} parent=11 // pred_check
          %p214 = pneg %p68
        $region14: #{tpu_custom_call.1} parent=11 // pred_check_branch
          %216 = sbr.rel (%p214) target = $region16
        $region15: #{tpu_custom_call.1} parent=11 // pred_region
          %s218 = ssub.s32 2048, 2048
          %219 = vsyncadd [#allocation6], %s218
          %s220 = sshll.u32 [#allocation5], 4
          %s221 = int_to_ptr.vmem [resolvable:$true] %s220
          %226 = dma.hbm_to_vmem [thread:$0]  %s1, 2048, %s221, [#allocation6], 128, 128, 8
        $region16: #{tpu_custom_call.1} parent=11 // pred_fallthru
          _
        // Predicated region
        $region17: #{tpu_custom_call.1} parent=11 // pred_check
          %p227 = pneg %p89
        $region18: #{tpu_custom_call.1} parent=11 // pred_check_branch
          %229 = sbr.rel (%p227) target = $region20
        $region19: #{tpu_custom_call.1} parent=11 // pred_region
          _
        $region20: #{tpu_custom_call.1} parent=11 // pred_fallthru
          _
        // Predicated region
        $region21: #{tpu_custom_call.1} parent=11 // pred_check
          %p230 = pneg %p110
        $region22: #{tpu_custom_call.1} parent=11 // pred_check_branch
          %232 = sbr.rel (%p230) target = $region24
        $region23: #{tpu_custom_call.1} parent=11 // pred_region
          %s234 = ssub.s32 1024, 1024
          %235 = vsyncadd [#allocation6], %s234
          %s236 = sshll.u32 [#allocation7], 4
          %s237 = int_to_ptr.vmem [resolvable:$true] %s236
          %242 = dma.hbm_to_vmem [thread:$0]  %s3, 1024, %s237, [#allocation6], 64, 64, 4
        $region24: #{tpu_custom_call.1} parent=11 // pred_fallthru
          _
        // Predicated region
        $region25: #{tpu_custom_call.1} parent=11 // pred_check
          %p243 = pneg %p131
        $region26: #{tpu_custom_call.1} parent=11 // pred_check_branch
          %245 = sbr.rel (%p243) target = $region28
        $region27: #{tpu_custom_call.1} parent=11 // pred_region
          _
        $region28: #{tpu_custom_call.1} parent=11 // pred_fallthru
          _
        // Predicated region
        $region29: #{tpu_custom_call.1} parent=11 // pred_check
          %p246 = pneg %p152
        $region30: #{tpu_custom_call.1} parent=11 // pred_check_branch
          %248 = sbr.rel (%p246) target = $region32
        $region31: #{tpu_custom_call.1} parent=11 // pred_region
          %s250 = ssub.s32 1024, 1024
          %251 = vsyncadd [#allocation9], %s250
          %s252 = sshll.u32 [#allocation8], 4
          %s253 = int_to_ptr.vmem [resolvable:$true] %s252
          %258 = dma.hbm_to_vmem [thread:$0]  %s5, 1024, %s253, [#allocation9], 64, 64, 4
        $region32: #{tpu_custom_call.1} parent=11 // pred_fallthru
          _
        // Predicated region
        $region33: #{tpu_custom_call.1} parent=11 // pred_check
          %p259 = pneg %p173
        $region34: #{tpu_custom_call.1} parent=11 // pred_check_branch
          %261 = sbr.rel (%p259) target = $region36
        $region35: #{tpu_custom_call.1} parent=11 // pred_region
          _
        $region36: #{tpu_custom_call.1} parent=11 // pred_fallthru
          _
      $region12: #{tpu_custom_call.1} parent=5 // pred_fallthru
        _
      %p262 = scmp.lt.s32.totalorder %s21, 2
      // Predicated region
      $region37: #{tpu_custom_call.1} parent=5 // pred_check
        %p263 = pneg %p262
      $region38: #{tpu_custom_call.1} parent=5 // pred_check_branch
        %265 = sbr.rel (%p263) target = $region40
      $region39: #{tpu_custom_call.1} parent=5 // pred_region
        // Predicated region
        $region41: #{tpu_custom_call.1} parent=39 // pred_check
          %p266 = pneg %p41
        $region42: #{tpu_custom_call.1} parent=39 // pred_check_branch
          %268 = sbr.rel (%p266) target = $region44
        $region43: #{tpu_custom_call.1} parent=39 // pred_region
          %s269 = sand.u32 %s31, 1
          %s270 = scalar_lea.sflag [#allocation3], %s269
          %s271 = sand.u32 %s31, 1
          %s272 = smul.addr %s271, 16
          %s273 = scalar_lea.vmem [#allocation2], %s272
          %s274 = smul.u32 4, %s21
          %s276 = ssub.s32 256, 256
          %277 = vsyncadd %s270, %s276
          %s278 = smul.addr %s274, 64
          %s279 = scalar_lea.hbm %s0, %s278
          %s280 = sshll.u32 %s273, 4
          %s281 = int_to_ptr.vmem [resolvable:$true] %s280
          %286 = dma.hbm_to_vmem [thread:$0]  %s279, 256, %s281, %s270, 64, 64, 4
        $region44: #{tpu_custom_call.1} parent=39 // pred_fallthru
          _
      $region40: #{tpu_custom_call.1} parent=5 // pred_fallthru
        _
      %p287 = scmp.le.s32.totalorder 1, %s21
      %p288 = scmp.lt.s32.totalorder %s21, 3
      %p289 = pnand %p287, %p288
      %p290 = pneg %p289
      // Predicated region
      $region45: #{tpu_custom_call.1} parent=5 // pred_check
        _
      $region46: #{tpu_custom_call.1} parent=5 // pred_check_branch
        %292 = sbr.rel (%p289) target = $region48
      $region47: #{tpu_custom_call.1} parent=5 // pred_region
        %s293 = ssub.s32 %s21, 1
        %s294 = sand.u32 %s34, 1
        %s295 = scalar_lea.sflag [#allocation3], %s294
        %s296 = sand.u32 %s34, 1
        %s297 = smul.addr %s296, 16
        %s298 = scalar_lea.vmem [#allocation2], %s297
        // Predicated region
        $region49: #{tpu_custom_call.1} parent=47 // pred_check
          %p299 = pneg %p47
        $region50: #{tpu_custom_call.1} parent=47 // pred_check_branch
          %301 = sbr.rel (%p299) target = $region52
        $region51: #{tpu_custom_call.1} parent=47 // pred_region
          %302 = dma.done %s295, 256
        $region52: #{tpu_custom_call.1} parent=47 // pred_fallthru
          _
        // Predicated region
        $region53: #{tpu_custom_call.1} parent=47 // pred_check
          %p303 = pneg %p68
        $region54: #{tpu_custom_call.1} parent=47 // pred_check_branch
          %305 = sbr.rel (%p303) target = $region56
        $region55: #{tpu_custom_call.1} parent=47 // pred_region
          %306 = dma.done [#allocation6], 2048
        $region56: #{tpu_custom_call.1} parent=47 // pred_fallthru
          _
        // Predicated region
        $region57: #{tpu_custom_call.1} parent=47 // pred_check
          %p307 = pneg %p110
        $region58: #{tpu_custom_call.1} parent=47 // pred_check_branch
          %309 = sbr.rel (%p307) target = $region60
        $region59: #{tpu_custom_call.1} parent=47 // pred_region
          %310 = dma.done [#allocation6], 1024
        $region60: #{tpu_custom_call.1} parent=47 // pred_fallthru
          _
        // Predicated region
        $region61: #{tpu_custom_call.1} parent=47 // pred_check
          %p311 = pneg %p152
        $region62: #{tpu_custom_call.1} parent=47 // pred_check_branch
          %313 = sbr.rel (%p311) target = $region64
        $region63: #{tpu_custom_call.1} parent=47 // pred_region
          %314 = dma.done [#allocation9], 1024
        $region64: #{tpu_custom_call.1} parent=47 // pred_fallthru
          _
        %s315 = sand.u32 %s34, 1
        %s316 = scalar_lea.sflag [#allocation3], %s315
        %s317 = sand.u32 %s34, 1
        %s318 = smul.addr %s317, 16
        %s319 = scalar_lea.vmem [#allocation2], %s318
        %p320 = pneg %p47
        %p321 = pneg %p44
        %p322 = pneg %p68
        %p323 = pneg %p65
        %p324 = pneg %p89
        %p325 = pneg %p86
        %p326 = pneg %p110
        %p327 = pneg %p107
        %p328 = pneg %p131
        %p329 = pneg %p128
        %p330 = pneg %p152
        %p331 = pneg %p149
        %p332 = pneg %p173
        %p333 = pneg %p170
        %p334 = pneg %p199
        %p335 = pneg %p196
        %s336 = sand.u32 %s186, 1
        %s337 = scalar_lea.sflag [#allocation4], %s336
        %s338 = sand.u32 %s186, 1
        %s339 = smul.addr %s338, 32
        %s340 = scalar_lea.vmem [#allocation10], %s339
        %s341 = smul.u32 4, %s26
        %s342 = smul.u32 4, %s26
        %v344 = vld [vmem:[%s298] sm:$0xf]
        %v345 = vld [vmem:[%s298 + $0x4] sm:$0xf]
        %v346 = vld [vmem:[%s298 + $0x8] sm:$0xf]
        %v347 = vld [vmem:[%s298 + $0xc] sm:$0xf]
        %v348 = vld [vmem:[#allocation5] sm:$0xff]
        %v349 = vld [vmem:[#allocation5 + $0x8] sm:$0xff]
        %v350 = vld [vmem:[#allocation5 + $0x10] sm:$0xff]
        %v351 = vld [vmem:[#allocation5 + $0x18] sm:$0xff]
        %v352 = vld [vmem:[#allocation5 + $0x20] sm:$0xff]
        %v353 = vld [vmem:[#allocation5 + $0x28] sm:$0xff]
        %v354 = vld [vmem:[#allocation5 + $0x30] sm:$0xff]
        %v355 = vld [vmem:[#allocation5 + $0x38] sm:$0xff]
        %v356 = vld [vmem:[#allocation5 + $0x40] sm:$0xff]
        %v357 = vld [vmem:[#allocation5 + $0x48] sm:$0xff]
        %v358 = vld [vmem:[#allocation5 + $0x50] sm:$0xff]
        %v359 = vld [vmem:[#allocation5 + $0x58] sm:$0xff]
        %v360 = vld [vmem:[#allocation5 + $0x60] sm:$0xff]
        %v361 = vld [vmem:[#allocation5 + $0x68] sm:$0xff]
        %v362 = vld [vmem:[#allocation5 + $0x70] sm:$0xff]
        %v363 = vld [vmem:[#allocation5 + $0x78] sm:$0xff]
        %v364 = vld [vmem:[%s2] sm:$0x3]
        %v366 = vlaneseq
        %v367 = vshrl.u32 %v366, 7
        %v368 = vsub.s32 0, %v367
        %v369 = vrot.slane %v364, %v368
        %v370 = vlaneseq
        %v371 = vshrl.u32 %v370, 7
        %v372 = vsub.s32 1, %v371
        %v373 = vrot.slane %v364, %v372
        %v380 = vunpack.c.l.b16 %v344
        %v381 = vunpack.c.l.b16 %v345
        %v382 = vunpack.c.l.b16 %v346
        %v383 = vunpack.c.l.b16 %v347
        %v384 = vpack.c.b16 %v381, %v380
        %v385 = vpack.c.b16 %v383, %v382
        %v404 = vunpack.c.l.b16 %v348
        %v405 = vunpack.c.h.b16 %v348
        %v406 = vunpack.c.l.b16 %v349
        %v407 = vunpack.c.h.b16 %v349
        %v408 = vunpack.c.l.b16 %v350
        %v409 = vunpack.c.h.b16 %v350
        %v410 = vunpack.c.l.b16 %v351
        %v411 = vunpack.c.h.b16 %v351
        %v412 = vunpack.c.l.b16 %v352
        %v413 = vunpack.c.h.b16 %v352
        %v414 = vunpack.c.l.b16 %v353
        %v415 = vunpack.c.h.b16 %v353
        %v416 = vunpack.c.l.b16 %v354
        %v417 = vunpack.c.h.b16 %v354
        %v418 = vunpack.c.l.b16 %v355
        %v419 = vunpack.c.h.b16 %v355
        %v420 = vunpack.c.l.b16 %v356
        %v421 = vunpack.c.h.b16 %v356
        %v422 = vunpack.c.l.b16 %v357
        %v423 = vunpack.c.h.b16 %v357
        %v424 = vunpack.c.l.b16 %v358
        %v425 = vunpack.c.h.b16 %v358
        %v426 = vunpack.c.l.b16 %v359
        %v427 = vunpack.c.h.b16 %v359
        %v428 = vunpack.c.l.b16 %v360
        %v429 = vunpack.c.h.b16 %v360
        %v430 = vunpack.c.l.b16 %v361
        %v431 = vunpack.c.h.b16 %v361
        %v432 = vunpack.c.l.b16 %v362
        %v433 = vunpack.c.h.b16 %v362
        %v434 = vunpack.c.l.b16 %v363
        %v435 = vunpack.c.h.b16 %v363
        %v436 = vpack.c.b16 %v406, %v404
        %v437 = vpack.c.b16 %v407, %v405
        %v438 = vpack.c.b16 %v410, %v408
        %v439 = vpack.c.b16 %v411, %v409
        %v440 = vpack.c.b16 %v414, %v412
        %v441 = vpack.c.b16 %v415, %v413
        %v442 = vpack.c.b16 %v418, %v416
        %v443 = vpack.c.b16 %v419, %v417
        %v444 = vpack.c.b16 %v422, %v420
        %v445 = vpack.c.b16 %v423, %v421
        %v446 = vpack.c.b16 %v426, %v424
        %v447 = vpack.c.b16 %v427, %v425
        %v448 = vpack.c.b16 %v430, %v428
        %v449 = vpack.c.b16 %v431, %v429
        %v450 = vpack.c.b16 %v434, %v432
        %v451 = vpack.c.b16 %v435, %v433
        %468 = vmatprep.subr.bf16.mxu0 %v437
        %469 = vmatpush1.bf16.msra.mxu0 %v436
        %470 = vmatprep.subr.bf16.mxu0 %v439
        %471 = vmatpush1.bf16.msra.mxu0 %v438
        %472 = vmatprep.subr.bf16.mxu0 %v441
        %473 = vmatpush1.bf16.msra.mxu0 %v440
        %474 = vmatprep.subr.bf16.mxu0 %v443
        %475 = vmatpush1.bf16.msra.mxu0 %v442
        %476 = vmatprep.subr.bf16.mxu0 %v445
        %477 = vmatpush1.bf16.msra.mxu0 %v444
        %478 = vmatprep.subr.bf16.mxu0 %v447
        %479 = vmatpush1.bf16.msra.mxu0 %v446
        %480 = vmatprep.subr.bf16.mxu0 %v449
        %481 = vmatpush1.bf16.msra.mxu0 %v448
        %482 = vmatprep.subr.bf16.mxu0 %v451
        %483 = vmatpush1.bf16.msra.mxu0 %v450
        %484 = vmatprep.subr.bf16.mxu0 0
        %485 = vmatpush1.bf16.msra.mxu0 0
        %486 = vmatprep.subr.bf16.mxu0 0
        %487 = vmatpush1.bf16.msra.mxu0 0
        %488 = vmatprep.subr.bf16.mxu0 0
        %489 = vmatpush1.bf16.msra.mxu0 0
        %490 = vmatprep.subr.bf16.mxu0 0
        %491 = vmatpush1.bf16.msra.mxu0 0
        %492 = vmatprep.subr.bf16.mxu0 0
        %493 = vmatpush1.bf16.msra.mxu0 0
        %494 = vmatprep.subr.bf16.mxu0 0
        %495 = vmatpush1.bf16.msra.mxu0 0
        %496 = vmatprep.subr.bf16.mxu0 0
        %497 = vmatpush1.bf16.msra.mxu0 0
        %498 = vmatprep.subr.bf16.mxu0 0
        %499 = vmatpush1.bf16.msra.mxu0 0
        %500 = vmatprep.mubr.bf16.mxu0 0
        %501 = vmatmul.mubr.bf16.gmra.mrb[0].mxu0 %v384
        %v502 = vpop.f32.mrb[0].mxu0
        %v503 = vadd.f32 %v369, %v502
        %v504 = vpop.f32.mrb[0].mxu0
        %v505 = vadd.f32 %v373, %v504
        %v506 = vpop.f32.mrb[0].mxu0
        %v507 = vadd.f32 %v369, %v506
        %v508 = vpop.f32.mrb[0].mxu0
        %v509 = vadd.f32 %v373, %v508
        %510 = vmatprep.mubr.bf16.mxu0 0
        %511 = vmatmul.mubr.bf16.gmra.mrb[0].mxu0 %v385
        %v512 = vpop.f32.mrb[0].mxu0
        %v513 = vadd.f32 %v369, %v512
        %v514 = vpop.f32.mrb[0].mxu0
        %v515 = vadd.f32 %v373, %v514
        %v516 = vpop.f32.mrb[0].mxu0
        %v517 = vadd.f32 %v369, %v516
        %v518 = vpop.f32.mrb[0].mxu0
        %v519 = vadd.f32 %v373, %v518
        %520 = vdwg.mxu0
        %v521 = vmax.f32 %v503, 0.0
        %v522 = vmax.f32 %v507, 0.0
        %v523 = vmax.f32 %v513, 0.0
        %v524 = vmax.f32 %v517, 0.0
        %v525 = vpack.c.bf16 %v522, %v521
        %v526 = vpack.c.bf16 %v524, %v523
        %v527 = vld [vmem:[#allocation7] sm:$0xf]
        %v528 = vld [vmem:[#allocation7 + $0x4] sm:$0xf]
        %v529 = vld [vmem:[#allocation7 + $0x8] sm:$0xf]
        %v530 = vld [vmem:[#allocation7 + $0xc] sm:$0xf]
        %v531 = vld [vmem:[#allocation7 + $0x10] sm:$0xf]
        %v532 = vld [vmem:[#allocation7 + $0x14] sm:$0xf]
        %v533 = vld [vmem:[#allocation7 + $0x18] sm:$0xf]
        %v534 = vld [vmem:[#allocation7 + $0x1c] sm:$0xf]
        %v535 = vld [vmem:[#allocation7 + $0x20] sm:$0xf]
        %v536 = vld [vmem:[#allocation7 + $0x24] sm:$0xf]
        %v537 = vld [vmem:[#allocation7 + $0x28] sm:$0xf]
        %v538 = vld [vmem:[#allocation7 + $0x2c] sm:$0xf]
        %v539 = vld [vmem:[#allocation7 + $0x30] sm:$0xf]
        %v540 = vld [vmem:[#allocation7 + $0x34] sm:$0xf]
        %v541 = vld [vmem:[#allocation7 + $0x38] sm:$0xf]
        %v542 = vld [vmem:[#allocation7 + $0x3c] sm:$0xf]
        %v543 = vld [vmem:[%s4] sm:$0x1]
        %v545 = vlaneseq
        %v546 = vshrl.u32 %v545, 7
        %v547 = vsub.s32 0, %v546
        %v548 = vrot.slane %v543, %v547
        %v566 = vunpack.c.l.b16 %v527
        %v567 = vunpack.c.l.b16 %v528
        %v568 = vunpack.c.l.b16 %v529
        %v569 = vunpack.c.l.b16 %v530
        %v570 = vunpack.c.l.b16 %v531
        %v571 = vunpack.c.l.b16 %v532
        %v572 = vunpack.c.l.b16 %v533
        %v573 = vunpack.c.l.b16 %v534
        %v574 = vunpack.c.l.b16 %v535
        %v575 = vunpack.c.l.b16 %v536
        %v576 = vunpack.c.l.b16 %v537
        %v577 = vunpack.c.l.b16 %v538
        %v578 = vunpack.c.l.b16 %v539
        %v579 = vunpack.c.l.b16 %v540
        %v580 = vunpack.c.l.b16 %v541
        %v581 = vunpack.c.l.b16 %v542
        %v582 = vpack.c.b16 %v567, %v566
        %v583 = vpack.c.b16 %v569, %v568
        %v584 = vpack.c.b16 %v571, %v570
        %v585 = vpack.c.b16 %v573, %v572
        %v586 = vpack.c.b16 %v575, %v574
        %v587 = vpack.c.b16 %v577, %v576
        %v588 = vpack.c.b16 %v579, %v578
        %v589 = vpack.c.b16 %v581, %v580
        %598 = vmatprep.subr.bf16.mxu0 0
        %599 = vmatpush1.bf16.msra.mxu0 %v582
        %600 = vmatprep.subr.bf16.mxu0 0
        %601 = vmatpush1.bf16.msra.mxu0 %v583
        %602 = vmatprep.subr.bf16.mxu0 0
        %603 = vmatpush1.bf16.msra.mxu0 %v584
        %604 = vmatprep.subr.bf16.mxu0 0
        %605 = vmatpush1.bf16.msra.mxu0 %v585
        %606 = vmatprep.subr.bf16.mxu0 0
        %607 = vmatpush1.bf16.msra.mxu0 %v586
        %608 = vmatprep.subr.bf16.mxu0 0
        %609 = vmatpush1.bf16.msra.mxu0 %v587
        %610 = vmatprep.subr.bf16.mxu0 0
        %611 = vmatpush1.bf16.msra.mxu0 %v588
        %612 = vmatprep.subr.bf16.mxu0 0
        %613 = vmatpush1.bf16.msra.mxu0 %v589
        %614 = vmatprep.subr.bf16.mxu0 0
        %615 = vmatpush1.bf16.msra.mxu0 0
        %616 = vmatprep.subr.bf16.mxu0 0
        %617 = vmatpush1.bf16.msra.mxu0 0
        %618 = vmatprep.subr.bf16.mxu0 0
        %619 = vmatpush1.bf16.msra.mxu0 0
        %620 = vmatprep.subr.bf16.mxu0 0
        %621 = vmatpush1.bf16.msra.mxu0 0
        %622 = vmatprep.subr.bf16.mxu0 0
        %623 = vmatpush1.bf16.msra.mxu0 0
        %624 = vmatprep.subr.bf16.mxu0 0
        %625 = vmatpush1.bf16.msra.mxu0 0
        %626 = vmatprep.subr.bf16.mxu0 0
        %627 = vmatpush1.bf16.msra.mxu0 0
        %628 = vmatprep.subr.bf16.mxu0 0
        %629 = vmatpush1.bf16.msra.mxu0 0
        %630 = vmatprep.mubr.bf16.mxu0 0
        %631 = vmatmul.mubr.bf16.gmra.mrb[0].mxu0 %v525
        %v632 = vpop.f32.mrb[0].mxu0
        %v633 = vadd.f32 %v548, %v632
        %v634 = vpop.f32.mrb[0].mxu0
        %v635 = vpop.f32.mrb[0].mxu0
        %v636 = vadd.f32 %v548, %v635
        %v637 = vpop.f32.mrb[0].mxu0
        %638 = vmatprep.mubr.bf16.mxu0 0
        %639 = vmatmul.mubr.bf16.gmra.mrb[0].mxu0 %v526
        %v640 = vpop.f32.mrb[0].mxu0
        %v641 = vadd.f32 %v548, %v640
        %v642 = vpop.f32.mrb[0].mxu0
        %v643 = vpop.f32.mrb[0].mxu0
        %v644 = vadd.f32 %v548, %v643
        %v645 = vpop.f32.mrb[0].mxu0
        %646 = vdwg.mxu0
        %v647 = vmax.f32 %v633, 0.0
        %v648 = vmax.f32 %v636, 0.0
        %v649 = vmax.f32 %v641, 0.0
        %v650 = vmax.f32 %v644, 0.0
        %v651 = vpack.c.bf16 %v648, %v647
        %v652 = vpack.c.bf16 %v650, %v649
        %v653 = vld [vmem:[#allocation8] sm:$0xf]
        %v654 = vld [vmem:[#allocation8 + $0x4] sm:$0xf]
        %v655 = vld [vmem:[#allocation8 + $0x8] sm:$0xf]
        %v656 = vld [vmem:[#allocation8 + $0xc] sm:$0xf]
        %v657 = vld [vmem:[#allocation8 + $0x10] sm:$0xf]
        %v658 = vld [vmem:[#allocation8 + $0x14] sm:$0xf]
        %v659 = vld [vmem:[#allocation8 + $0x18] sm:$0xf]
        %v660 = vld [vmem:[#allocation8 + $0x1c] sm:$0xf]
        %v661 = vld [vmem:[#allocation8 + $0x20] sm:$0xf]
        %v662 = vld [vmem:[#allocation8 + $0x24] sm:$0xf]
        %v663 = vld [vmem:[#allocation8 + $0x28] sm:$0xf]
        %v664 = vld [vmem:[#allocation8 + $0x2c] sm:$0xf]
        %v665 = vld [vmem:[#allocation8 + $0x30] sm:$0xf]
        %v666 = vld [vmem:[#allocation8 + $0x34] sm:$0xf]
        %v667 = vld [vmem:[#allocation8 + $0x38] sm:$0xf]
        %v668 = vld [vmem:[#allocation8 + $0x3c] sm:$0xf]
        %v669 = vld [vmem:[%s6] sm:$0x1]
        %v671 = vlaneseq
        %v672 = vshrl.u32 %v671, 7
        %v673 = vsub.s32 0, %v672
        %v674 = vrot.slane %v669, %v673
        %v692 = vunpack.c.l.b16 %v653
        %v693 = vunpack.c.l.b16 %v654
        %v694 = vunpack.c.l.b16 %v655
        %v695 = vunpack.c.l.b16 %v656
        %v696 = vunpack.c.l.b16 %v657
        %v697 = vunpack.c.l.b16 %v658
        %v698 = vunpack.c.l.b16 %v659
        %v699 = vunpack.c.l.b16 %v660
        %v700 = vunpack.c.l.b16 %v661
        %v701 = vunpack.c.l.b16 %v662
        %v702 = vunpack.c.l.b16 %v663
        %v703 = vunpack.c.l.b16 %v664
        %v704 = vunpack.c.l.b16 %v665
        %v705 = vunpack.c.l.b16 %v666
        %v706 = vunpack.c.l.b16 %v667
        %v707 = vunpack.c.l.b16 %v668
        %v708 = vpack.c.b16 %v693, %v692
        %v709 = vpack.c.b16 %v695, %v694
        %v710 = vpack.c.b16 %v697, %v696
        %v711 = vpack.c.b16 %v699, %v698
        %v712 = vpack.c.b16 %v701, %v700
        %v713 = vpack.c.b16 %v703, %v702
        %v714 = vpack.c.b16 %v705, %v704
        %v715 = vpack.c.b16 %v707, %v706
        %724 = vmatprep.subr.bf16.mxu0 0
        %725 = vmatpush1.bf16.msra.mxu0 %v708
        %726 = vmatprep.subr.bf16.mxu0 0
        %727 = vmatpush1.bf16.msra.mxu0 %v709
        %728 = vmatprep.subr.bf16.mxu0 0
        %729 = vmatpush1.bf16.msra.mxu0 %v710
        %730 = vmatprep.subr.bf16.mxu0 0
        %731 = vmatpush1.bf16.msra.mxu0 %v711
        %732 = vmatprep.subr.bf16.mxu0 0
        %733 = vmatpush1.bf16.msra.mxu0 %v712
        %734 = vmatprep.subr.bf16.mxu0 0
        %735 = vmatpush1.bf16.msra.mxu0 %v713
        %736 = vmatprep.subr.bf16.mxu0 0
        %737 = vmatpush1.bf16.msra.mxu0 %v714
        %738 = vmatprep.subr.bf16.mxu0 0
        %739 = vmatpush1.bf16.msra.mxu0 %v715
        %740 = vmatprep.subr.bf16.mxu0 0
        %741 = vmatpush1.bf16.msra.mxu0 0
        %742 = vmatprep.subr.bf16.mxu0 0
        %743 = vmatpush1.bf16.msra.mxu0 0
        %744 = vmatprep.subr.bf16.mxu0 0
        %745 = vmatpush1.bf16.msra.mxu0 0
        %746 = vmatprep.subr.bf16.mxu0 0
        %747 = vmatpush1.bf16.msra.mxu0 0
        %748 = vmatprep.subr.bf16.mxu0 0
        %749 = vmatpush1.bf16.msra.mxu0 0
        %750 = vmatprep.subr.bf16.mxu0 0
        %751 = vmatpush1.bf16.msra.mxu0 0
        %752 = vmatprep.subr.bf16.mxu0 0
        %753 = vmatpush1.bf16.msra.mxu0 0
        %754 = vmatprep.subr.bf16.mxu0 0
        %755 = vmatpush1.bf16.msra.mxu0 0
        %756 = vmatprep.mubr.bf16.mxu0 0
        %757 = vmatmul.mubr.bf16.gmra.mrb[0].mxu0 %v651
        %v758 = vpop.f32.mrb[0].mxu0
        %v759 = vadd.f32 %v674, %v758
        %v760 = vpop.f32.mrb[0].mxu0
        %v761 = vpop.f32.mrb[0].mxu0
        %v762 = vadd.f32 %v674, %v761
        %v763 = vpop.f32.mrb[0].mxu0
        %764 = vmatprep.mubr.bf16.mxu0 0
        %765 = vmatmul.mubr.bf16.gmra.mrb[0].mxu0 %v652
        %v766 = vpop.f32.mrb[0].mxu0
        %v767 = vadd.f32 %v674, %v766
        %v768 = vpop.f32.mrb[0].mxu0
        %v769 = vpop.f32.mrb[0].mxu0
        %v770 = vadd.f32 %v674, %v769
        %v771 = vpop.f32.mrb[0].mxu0
        %772 = vdwg.mxu0
        %v773 = vmax.f32 %v759, 0.0
        %v774 = vmax.f32 %v762, 0.0
        %v775 = vmax.f32 %v767, 0.0
        %v776 = vmax.f32 %v770, 0.0
        %v777 = vadd.f32 %v773, %v505
        %v778 = vadd.f32 %v774, %v509
        %v779 = vadd.f32 %v775, %v515
        %v780 = vadd.f32 %v776, %v519
        %781 = vst [vmem:[%s340] sm:$0xff] %v777
        %782 = vst [vmem:[%s340 + $0x8] sm:$0xff] %v778
        %783 = vst [vmem:[%s340 + $0x10] sm:$0xff] %v779
        %784 = vst [vmem:[%s340 + $0x18] sm:$0xff] %v780
        %s785 = sand.u32 %s186, 1
        %s786 = scalar_lea.sflag [#allocation4], %s785
        %s787 = sand.u32 %s186, 1
        %s788 = smul.addr %s787, 32
        %s789 = scalar_lea.vmem [#allocation10], %s788
        // Predicated region
        $region65: #{tpu_custom_call.1} parent=47 // pred_check
          %p790 = pneg %p196
        $region66: #{tpu_custom_call.1} parent=47 // pred_check_branch
          %792 = sbr.rel (%p790) target = $region68
        $region67: #{tpu_custom_call.1} parent=47 // pred_region
          %s793 = smul.u32 4, %s26
          %s795 = ssub.s32 512, 512
          %796 = vsyncadd %s786, %s795
          %s797 = smul.addr %s793, 128
          %s798 = scalar_lea.hbm %s7, %s797
          %s799 = sshll.u32 %s789, 4
          %s800 = int_to_ptr.vmem [resolvable:$true] %s799
          %805 = dma.vmem_to_hbm [thread:$0]  %s800, 512, %s798, %s786, 128, 128, 8
        $region68: #{tpu_custom_call.1} parent=47 // pred_fallthru
          _
      $region48: #{tpu_custom_call.1} parent=5 // pred_fallthru
        _
      %p806 = scmp.le.s32.totalorder 2, %s21
      // Predicated region
      $region69: #{tpu_custom_call.1} parent=5 // pred_check
        %p807 = pneg %p806
      $region70: #{tpu_custom_call.1} parent=5 // pred_check_branch
        %809 = sbr.rel (%p807) target = $region72
      $region71: #{tpu_custom_call.1} parent=5 // pred_region
        %s810 = ssub.s32 %s21, 2
        // Predicated region
        $region73: #{tpu_custom_call.1} parent=71 // pred_check
          %p811 = pneg %p202
        $region74: #{tpu_custom_call.1} parent=71 // pred_check_branch
          %813 = sbr.rel (%p811) target = $region76
        $region75: #{tpu_custom_call.1} parent=71 // pred_region
          %s814 = sand.u32 %s187, 1
          %s815 = scalar_lea.sflag [#allocation4], %s814
          %s816 = sand.u32 %s187, 1
          %s817 = smul.addr %s816, 32
          %s818 = scalar_lea.vmem [#allocation10], %s817
          %819 = dma.done %s815, 512
        $region76: #{tpu_custom_call.1} parent=71 // pred_fallthru
          _
      $region72: #{tpu_custom_call.1} parent=5 // pred_fallthru
        _
    $region6: #{tpu_custom_call.1} parent=1 // loop_footer
      %s25 = sadd.s32 1, %s21
    $region7: #{tpu_custom_call.1} parent=1 // loop_footer_branch
      %20 = sbr.rel target = $region3
    $region8: #{tpu_custom_call.1} parent=1 // loop_exit
      _
    %820 = vsyncpa [#allocation3], 1
    %s821 = scalar_lea.sflag [#allocation3], 1
    %822 = vsyncpa %s821, 1
    %823 = vsyncpa [#allocation6], 1
    %824 = vsyncpa [#allocation9], 1
    %825 = vsyncpa [#allocation4], 1
    %s826 = scalar_lea.sflag [#allocation4], 1
    %827 = vsyncpa %s826, 1

</llo_original>
